<compile_context>
chip_gen: v6e
topology: v6e:2x2x1
jax: 0.10.0
libtpu: 0.0.40
codegen_flags: <defaults>
</compile_context>

<pallas_src>
import functools
import jax
import jax.numpy as jnp
from jax.experimental import pallas as pl
from jax.experimental.pallas import tpu as pltpu

# ----------------------------- config ---------------------------------------
CONFIG = dict(
    input_dim=8,
    action_dim=4,
    embedding_dim=32,   # equal to hidden_dim so per-layer LSTM weights stack
    hidden_dim=32,
    n_layers=2,
    dropout=0.0,
    horizon=3,
    lr_encoder=1e-3,
    lr_decoder=1e-3,
    mlp_add=False,
)
SEQ_LEN = 8
BATCH = 2

B_BLK = 8        # batch rows per grid step (sublane width)
OUT_PAD = 128    # head output padded to a full lane width (unmasked vst)
ROW_ALIGN = 16   # bf16 packed-sublane tile height -> keep slab offsets aligned


# --------------------------- fused Pallas kernel -----------------------------
def mind_model_kernel(obs_ref, act_ref, prev_ref, w_ref, b_ref, out_ref, *,
                      seq, n_layers, hidden, input_dim, action_dim,
                      w_offs, b_offs):
    """Fused MindModel.forward for one batch block.

    obs_ref:  [seq, B, D]  f32   time-major observations
    act_ref:  [B, 1]       i32   discrete action index
    prev_ref: [B, D]       f32
    w_ref:    [R, 128]     bf16  packed matmul weights (i/f/o cols pre-halved)
    b_ref:    [Rb, 128]    f32   packed biases        (i/f/o cols pre-halved)
    out_ref:  [B, 128]     f32   [next_obs | reward | sigmoid(done) | 0-pad]
    """
    f32, bf16 = jnp.float32, jnp.bfloat16
    B = prev_ref.shape[0]
    H, D, A = hidden, input_dim, action_dim
    H4 = 4 * H

    def w_view(name, rows, cols):
        r0 = w_offs[name]
        return w_ref[r0:r0 + rows, :cols]

    def b_view(name, cols):
        r0 = b_offs[name]
        return b_ref[r0:r0 + 1, :cols]

    # Single-tanh gate activation: i/f/o gate weight columns & biases were
    # pre-scaled by 0.5 in pack_params, so one full-width tanh recovers all
    # four gates:
    #   g lanes     : tanh(x)
    #   i/f/o lanes : sigmoid(x) = 0.5 * tanh(x/2) + 0.5
    # (one EUP op + one FMA per step instead of tanh + sigmoid + select).
    lane = jax.lax.broadcasted_iota(jnp.int32, (B, H4), 1)
    is_g = (lane >= 2 * H) & (lane < 3 * H)
    g_scale = jnp.where(is_g, 1.0, 0.5).astype(f32)   # hoisted out of loops
    g_shift = jnp.where(is_g, 0.0, 0.5).astype(f32)

    def gate_act(gates):
        return jnp.tanh(gates) * g_scale + g_shift

    def lstm_step(gates, c_prev):
        a = gate_act(gates)
        i_g = a[:, 0 * H:1 * H]
        f_g = a[:, 1 * H:2 * H]
        g_g = a[:, 2 * H:3 * H]
        o_g = a[:, 3 * H:4 * H]
        c = f_g * c_prev + i_g * g_g
        return o_g * jnp.tanh(c), c

    # ------------------------------ encoder ----------------------------------
    # (nn.Dropout layers are identity in eval-mode forward.)
    w_emb = w_view('enc_w_emb', D, H)
    w_ih0 = w_view('enc_w_ih0', H, H4)
    w_hh0 = w_view('enc_w_hh0', H, H4)

    x_flat = obs_ref[...].reshape(seq * B, D)
    emb = (jnp.dot(x_flat.astype(bf16), w_emb, preferred_element_type=f32)
           + b_view('enc_b_emb', H))                              # [seq*B, H]
    # layer-0 input projection hoisted over all timesteps (one big matmul)
    gates_x0 = (jnp.dot(emb.astype(bf16), w_ih0, preferred_element_type=f32)
                + b_view('enc_b0', H4))                           # [seq*B, 4H]

    # stacked [w_ih; w_hh] weights / pre-broadcast biases for layers >= 1
    w_up = [w_view(f'enc_w_l{l}', 2 * H, H4) for l in range(1, n_layers)]
    b_up = [jnp.broadcast_to(b_view(f'enc_b{l}', H4), (B, H4))
            for l in range(1, n_layers)]

    h = [jnp.zeros((B, H), f32) for _ in range(n_layers)]
    c = [jnp.zeros((B, H), f32) for _ in range(n_layers)]

    # Wavefront schedule: layer l's step t is emitted right after layer l-1's
    # step t (stacked [h_below | h] matmul), so each layer's chain depends only
    # on its own previous step plus the freshly produced hidden below it ->
    # DAG critical path = seq + n_layers - 1 LSTM steps, and the scheduler can
    # overlap layer-l step t with layer-0 step t+1.
    for t in range(seq):
        g0 = gates_x0[t * B:(t + 1) * B, :] + jnp.dot(
            h[0].astype(bf16), w_hh0, preferred_element_type=f32)
        h[0], c[0] = lstm_step(g0, c[0])
        for l in range(1, n_layers):
            xh = jnp.concatenate([h[l - 1], h[l]], axis=-1)       # [B, 2H]
            gl = jnp.dot(xh.astype(bf16), w_up[l - 1],
                         preferred_element_type=f32) + b_up[l - 1]
            h[l], c[l] = lstm_step(gl, c[l])
    # Encoder cell state is unused by the decoder -> never written to HBM.

    # --------------------------- decoder (1 step) -----------------------------
    # context embed: prev_obs @ W_obs + one_hot(action) @ W_act + b
    onehot = (jax.lax.broadcasted_iota(jnp.int32, (B, A), 1)
              == act_ref[...]).astype(bf16)                        # [B, A]
    x = (jnp.dot(prev_ref[...].astype(bf16), w_view('dec_w_ctx_obs', D, H),
                 preferred_element_type=f32)
         + jnp.dot(onehot, w_view('dec_w_ctx_act', A, H),
                   preferred_element_type=f32)
         + b_view('dec_b_ctx', H))                                 # [B, H]

    # one step through the stacked decoder LSTM; h0 = encoder hidden per layer,
    # c0 = zeros (torch.zeros_like(h) in MindDecoder), so f * c0 vanishes.
    for l in range(n_layers):
        xh = jnp.concatenate([x, h[l]], axis=-1)                   # [B, 2H]
        gl = (jnp.dot(xh.astype(bf16), w_view(f'dec_w_l{l}', 2 * H, H4),
                      preferred_element_type=f32) + b_view(f'dec_b{l}', H4))
        a = gate_act(gl)
        i_g = a[:, 0 * H:1 * H]
        g_g = a[:, 2 * H:3 * H]
        o_g = a[:, 3 * H:4 * H]
        x = o_g * jnp.tanh(i_g * g_g)

    # TODO(synk): optional MLP head (config['mlp_add']) not emitted; default False.

    # fused output heads, padded to 128 lanes for an unmasked full-width store
    head = (jnp.dot(x.astype(bf16), w_view('dec_w_heads', H, OUT_PAD),
                    preferred_element_type=f32) + b_view('dec_b_heads', OUT_PAD))
    out_lane = jax.lax.broadcasted_iota(jnp.int32, (B, OUT_PAD), 1)
    head = jnp.where(out_lane == D + 1, jax.nn.sigmoid(head), head)
    out_ref[...] = head


# ------------------------------- wrapper --------------------------------------
def _pad_axis(x, axis, target):
    pad = target - x.shape[axis]
    if pad <= 0:
        return x
    widths = [(0, 0)] * x.ndim
    widths[axis] = (0, pad)
    return jnp.pad(x, widths)


def mind_model_forward(packed, obs, action, prev_obs, config=CONFIG):
    """MindModel.forward: encoder(obs) -> decoder(hidden, action, prev_obs)."""
    seq, batch, D = obs.shape
    H = config['hidden_dim']
    L = config['n_layers']
    A = config['action_dim']

    n_blk = max(1, (batch + B_BLK - 1) // B_BLK)
    Bp = n_blk * B_BLK
    obs_p = _pad_axis(obs, 1, Bp)
    prev_p = _pad_axis(prev_obs, 0, Bp)
    act_p = _pad_axis(action.astype(jnp.int32), 0, Bp).reshape(Bp, 1)

    kernel = functools.partial(
        mind_model_kernel, seq=seq, n_layers=L, hidden=H, input_dim=D,
        action_dim=A, w_offs=packed['w_offs'], b_offs=packed['b_offs'])

    w_slab, b_slab = packed['w_slab'], packed['b_slab']

    head = pl.pallas_call(
        kernel,
        out_shape=jax.ShapeDtypeStruct((Bp, OUT_PAD), jnp.float32),
        grid=(n_blk,),
        in_specs=[
            pl.BlockSpec((seq, B_BLK, D), lambda b: (0, b, 0)),      # obs
            pl.BlockSpec((B_BLK, 1), lambda b: (b, 0)),              # action
            pl.BlockSpec((B_BLK, D), lambda b: (b, 0)),              # prev_obs
            # weights/biases: constant block index -> stay VMEM-resident
            pl.BlockSpec(w_slab.shape, lambda b: (0, 0)),
            pl.BlockSpec(b_slab.shape, lambda b: (0, 0)),
        ],
        out_specs=pl.BlockSpec((B_BLK, OUT_PAD), lambda b: (b, 0)),
        compiler_params=pltpu.CompilerParams(
            dimension_semantics=("parallel",)),   # shard batch blocks (v7x 2 TCs)
    )(obs_p, act_p, prev_p, w_slab, b_slab)

    head = head[:batch]
    next_obs = head[:, :D]
    reward = head[:, D:D + 1]
    done = head[:, D + 1:D + 2]
    return next_obs, reward, done


# -------------------------- parameter init / packing --------------------------
def _uniform(key, shape, bound):
    return jax.random.uniform(key, shape, jnp.float32, -bound, bound)


def init_params(key):
    """Logical (f32, [in, out]-transposed) parameters mirroring the PyTorch module."""
    cfg = CONFIG
    D, A, E, H, L = (cfg['input_dim'], cfg['action_dim'],
                     cfg['embedding_dim'], cfg['hidden_dim'], cfg['n_layers'])
    assert E == H, "embedding_dim must equal hidden_dim for stacked LSTM weights"
    keys = iter(jax.random.split(key, 24))
    p = {}

    kb = 1.0 / jnp.sqrt(D)
    p['enc_w_emb'] = _uniform(next(keys), (D, E), kb)
    p['enc_b_emb'] = _uniform(next(keys), (1, E), kb)

    kb = 1.0 / jnp.sqrt(H)
    p['enc_w_ih'] = _uniform(next(keys), (L, E, 4 * H), kb)
    p['enc_w_hh'] = _uniform(next(keys), (L, H, 4 * H), kb)
    p['enc_b'] = (_uniform(next(keys), (L, 1, 4 * H), kb)
                  + _uniform(next(keys), (L, 1, 4 * H), kb))   # b_ih + b_hh fused

    kb = 1.0 / jnp.sqrt(D + A)
    p['dec_w_ctx'] = _uniform(next(keys), (D + A, H), kb)
    p['dec_b_ctx'] = _uniform(next(keys), (1, H), kb)

    kb = 1.0 / jnp.sqrt(H)
    dec_w_ih = _uniform(next(keys), (L, H, 4 * H), kb)
    dec_w_hh = _uniform(next(keys), (L, H, 4 * H), kb)
    p['dec_w_cell'] = jnp.concatenate([dec_w_ih, dec_w_hh], axis=1)  # [L, 2H, 4H]
    p['dec_b'] = (_uniform(next(keys), (L, 1, 4 * H), kb)
                  + _uniform(next(keys), (L, 1, 4 * H), kb))

    w_obs = _uniform(next(keys), (H, D), kb)
    b_obs = _uniform(next(keys), (1, D), kb)
    w_rew = _uniform(next(keys), (H, 1), kb)
    b_rew = _uniform(next(keys), (1, 1), kb)
    w_done = _uniform(next(keys), (H, 1), kb)
    b_done = _uniform(next(keys), (1, 1), kb)
    p['dec_w_heads'] = jnp.concatenate([w_obs, w_rew, w_done], axis=1)  # [H, D+2]
    p['dec_b_heads'] = jnp.concatenate([b_obs, b_rew, b_done], axis=1)  # [1, D+2]
    return p


def _halve_sigmoid_gate_cols(w, H):
    # gate order (i, f, g, o): scale the sigmoid-gate columns (i, f, o) by 0.5
    # so the in-kernel single-tanh activation recovers sigmoid exactly.
    scale = jnp.concatenate([jnp.full((1, 2 * H), 0.5, jnp.float32),
                             jnp.ones((1, H), jnp.float32),
                             jnp.full((1, H), 0.5, jnp.float32)], axis=1)
    return w * scale


def pack_params(p, cfg=CONFIG):
    """Pack all matmul weights into one bf16 [rows,128] slab and all biases into
    one f32 [rows,128] slab (2 DMAs per call). Returns slabs + static row offsets."""
    D, A, H, L = (cfg['input_dim'], cfg['action_dim'], cfg['hidden_dim'],
                  cfg['n_layers'])
    assert 4 * H <= 128 and OUT_PAD == 128
    halve = lambda w: _halve_sigmoid_gate_cols(w, H)

    w_entries = [
        ('enc_w_emb', p['enc_w_emb']),                       # [D, H]
        ('enc_w_ih0', halve(p['enc_w_ih'][0])),              # [H, 4H]
        ('enc_w_hh0', halve(p['enc_w_hh'][0])),              # [H, 4H]
    ]
    for l in range(1, L):                                    # stacked [w_ih; w_hh]
        w_entries.append((f'enc_w_l{l}', halve(jnp.concatenate(
            [p['enc_w_ih'][l], p['enc_w_hh'][l]], axis=0))))  # [2H, 4H]
    w_entries.append(('dec_w_ctx_obs', p['dec_w_ctx'][:D]))  # [D, H]
    w_entries.append(('dec_w_ctx_act', p['dec_w_ctx'][D:]))  # [A, H]
    for l in range(L):
        w_entries.append((f'dec_w_l{l}', halve(p['dec_w_cell'][l])))  # [2H, 4H]
    w_entries.append(('dec_w_heads', p['dec_w_heads']))      # [H, D+2] (lane-padded)

    w_offs, blocks, r = {}, [], 0
    for name, w in w_entries:
        w_offs[name] = r
        rows = ((w.shape[0] + ROW_ALIGN - 1) // ROW_ALIGN) * ROW_ALIGN
        blk = jnp.zeros((rows, 128), jnp.float32)
        blk = blk.at[:w.shape[0], :w.shape[1]].set(w)
        blocks.append(blk)
        r += rows
    w_slab = jnp.concatenate(blocks, axis=0).astype(jnp.bfloat16)

    b_entries = [('enc_b_emb', p['enc_b_emb']),
                 ('enc_b0', halve(p['enc_b'][0]))]
    for l in range(1, L):
        b_entries.append((f'enc_b{l}', halve(p['enc_b'][l])))
    b_entries.append(('dec_b_ctx', p['dec_b_ctx']))
    for l in range(L):
        b_entries.append((f'dec_b{l}', halve(p['dec_b'][l])))
    b_entries.append(('dec_b_heads', p['dec_b_heads']))

    b_offs, rows = {}, []
    for i, (name, b) in enumerate(b_entries):
        b_offs[name] = i
        rows.append(jnp.zeros((1, 128), jnp.float32).at[:, :b.shape[1]].set(b))
    rows += [jnp.zeros((1, 128), jnp.float32)] * ((-len(rows)) % 8)
    b_slab = jnp.concatenate(rows, axis=0)

    return dict(w_slab=w_slab, b_slab=b_slab, w_offs=w_offs, b_offs=b_offs)


# ------------------------------- main ----------------------------------------
if __name__ == "__main__":
    key = jax.random.PRNGKey(0)
    k_par, k_obs, k_act, k_prev = jax.random.split(key, 4)

    params = init_params(k_par)
    packed = pack_params(params)

    cfg = CONFIG
    obs = jax.random.normal(k_obs, (SEQ_LEN, BATCH, cfg['input_dim']),
                            jnp.float32)                     # [seq, batch, input_dim]
    action = jax.random.randint(k_act, (BATCH,), 0, cfg['action_dim'],
                                dtype=jnp.int32)             # [batch]
    prev_obs = jax.random.normal(k_prev, (BATCH, cfg['input_dim']),
                                 jnp.float32)                # [batch, input_dim]

    # mirrors the decoder's action-range assertion
    assert int(jnp.max(action)) < cfg['action_dim']

    fwd = jax.jit(functools.partial(mind_model_forward, packed))
    next_obs, reward, done = fwd(obs, action, prev_obs)
    jax.block_until_ready((next_obs, reward, done))

    assert next_obs.shape == (BATCH, cfg['input_dim'])
    assert reward.shape == (BATCH, 1)
    assert done.shape == (BATCH, 1)
    assert bool(jnp.all(jnp.isfinite(next_obs)))
    assert bool(jnp.all((done >= 0.0) & (done <= 1.0)))

    print("KERNEL_OK")
</pallas_src>

<mosaic_0001>
module attributes {stable_mosaic.version = 11 : i64} {
  func.func @mind_model_kernel(%arg0: i32, %arg1: memref<8x8x8xf32, #tpu.memory_space<vmem>>, %arg2: memref<8x1xi32, #tpu.memory_space<vmem>>, %arg3: memref<8x8xf32, #tpu.memory_space<vmem>>, %arg4: memref<336x128xbf16, #tpu.memory_space<vmem>>, %arg5: memref<8x128xf32, #tpu.memory_space<vmem>>, %arg6: memref<8x128xf32, #tpu.memory_space<vmem>>) attributes {dimension_semantics = [#tpu.dimension_semantics<parallel>], iteration_bounds = array<i64: 1>, scalar_prefetch = 0 : i64, scratch_operands = 0 : i64, tpu.core_type = #tpu.core_type<tc>, window_params = [{transform_indices = @transform_0, window_bounds = array<i64: 8, 8, 8>}, {transform_indices = @transform_1, window_bounds = array<i64: 8, 1>}, {transform_indices = @transform_2, window_bounds = array<i64: 8, 8>}, {pipeline_mode = #tpu.pipeline_mode<synchronous>, transform_indices = @transform_3, window_bounds = array<i64: 336, 128>}, {pipeline_mode = #tpu.pipeline_mode<synchronous>, transform_indices = @transform_4, window_bounds = array<i64: 8, 128>}, {transform_indices = @transform_5, window_bounds = array<i64: 8, 128>}]} {
    %0 = tpu.iota {dimensions = array<i32: 1>} : vector<8x128xi32>
    %c64_i32 = arith.constant 64 : i32
    %1 = vector.broadcast %c64_i32 : i32 to vector<8x128xi32>
    %2 = arith.cmpi sge, %0, %1 : vector<8x128xi32>
    %c96_i32 = arith.constant 96 : i32
    %3 = vector.broadcast %c96_i32 : i32 to vector<8x128xi32>
    %4 = arith.cmpi slt, %0, %3 : vector<8x128xi32>
    %5 = arith.andi %2, %4 : vector<8x128xi1>
    %cst = arith.constant 1.000000e+00 : f32
    %cst_0 = arith.constant 5.000000e-01 : f32
    %6 = vector.broadcast %cst : f32 to vector<8x128xf32>
    %7 = vector.broadcast %cst_0 : f32 to vector<8x128xf32>
    %8 = arith.select %5, %6, %7 : vector<8x128xi1>, vector<8x128xf32>
    %cst_1 = arith.constant 0.000000e+00 : f32
    %cst_2 = arith.constant 5.000000e-01 : f32
    %9 = vector.broadcast %cst_1 : f32 to vector<8x128xf32>
    %10 = vector.broadcast %cst_2 : f32 to vector<8x128xf32>
    %11 = arith.select %5, %9, %10 : vector<8x128xi1>, vector<8x128xf32>
    %c0 = arith.constant 0 : index
    %c0_3 = arith.constant 0 : index
    %12 = vector.load %arg4[%c0, %c0_3] : memref<336x128xbf16, #tpu.memory_space<vmem>>, vector<8x32xbf16>
    %c16 = arith.constant 16 : index
    %c0_4 = arith.constant 0 : index
    %13 = vector.load %arg4[%c16, %c0_4] : memref<336x128xbf16, #tpu.memory_space<vmem>>, vector<32x128xbf16>
    %c48 = arith.constant 48 : index
    %c0_5 = arith.constant 0 : index
    %14 = vector.load %arg4[%c48, %c0_5] : memref<336x128xbf16, #tpu.memory_space<vmem>>, vector<32x128xbf16>
    %c0_6 = arith.constant 0 : index
    %c0_7 = arith.constant 0 : index
    %c0_8 = arith.constant 0 : index
    %15 = vector.load %arg1[%c0_6, %c0_7, %c0_8] : memref<8x8x8xf32, #tpu.memory_space<vmem>>, vector<8x8x8xf32>
    %16 = vector.shape_cast %15 : vector<8x8x8xf32> to vector<64x8xf32>
    %17 = arith.truncf %16 : vector<64x8xf32> to vector<64x8xbf16>
    %cst_9 = arith.constant dense<0.000000e+00> : vector<64x32xf32>
    %18 = tpu.matmul %17, %12, %cst_9 {dimension_numbers = #tpu.dot_dimension_numbers<[1], [0], [0], [1], [0, 0, 1, 1], [], []>} : vector<64x8xbf16>, vector<8x32xbf16>, vector<64x32xf32> -> vector<64x32xf32>
    %c0_10 = arith.constant 0 : index
    %c0_11 = arith.constant 0 : index
    %19 = vector.load %arg5[%c0_10, %c0_11] : memref<8x128xf32, #tpu.memory_space<vmem>>, vector<1x32xf32>
    %20 = vector.broadcast %19 : vector<1x32xf32> to vector<64x32xf32>
    %21 = arith.addf %18, %20 : vector<64x32xf32>
    %22 = arith.truncf %21 : vector<64x32xf32> to vector<64x32xbf16>
    %cst_12 = arith.constant dense<0.000000e+00> : vector<64x128xf32>
    %23 = tpu.matmul %22, %13, %cst_12 {dimension_numbers = #tpu.dot_dimension_numbers<[1], [0], [0], [1], [0, 0, 1, 1], [], []>} : vector<64x32xbf16>, vector<32x128xbf16>, vector<64x128xf32> -> vector<64x128xf32>
    %c1 = arith.constant 1 : index
    %c0_13 = arith.constant 0 : index
    %24 = vector.load %arg5[%c1, %c0_13] : memref<8x128xf32, #tpu.memory_space<vmem>>, vector<1x128xf32>
    %25 = vector.broadcast %24 : vector<1x128xf32> to vector<64x128xf32>
    %26 = arith.addf %23, %25 : vector<64x128xf32>
    %c80 = arith.constant 80 : index
    %c0_14 = arith.constant 0 : index
    %27 = vector.load %arg4[%c80, %c0_14] : memref<336x128xbf16, #tpu.memory_space<vmem>>, vector<64x128xbf16>
    %c2 = arith.constant 2 : index
    %c0_15 = arith.constant 0 : index
    %28 = vector.load %arg5[%c2, %c0_15] : memref<8x128xf32, #tpu.memory_space<vmem>>, vector<1x128xf32>
    %29 = vector.shape_cast %28 : vector<1x128xf32> to vector<1x128xf32>
    %30 = vector.broadcast %29 : vector<1x128xf32> to vector<8x128xf32>
    %cst_16 = arith.constant 0.000000e+00 : f32
    %31 = vector.broadcast %cst_16 : f32 to vector<8x32xf32>
    %cst_17 = arith.constant 0.000000e+00 : f32
    %32 = vector.broadcast %cst_17 : f32 to vector<8x32xf32>
    %cst_18 = arith.constant 0.000000e+00 : f32
    %33 = vector.broadcast %cst_18 : f32 to vector<8x32xf32>
    %cst_19 = arith.constant 0.000000e+00 : f32
    %34 = vector.broadcast %cst_19 : f32 to vector<8x32xf32>
    %35 = vector.extract_strided_slice %26 {offsets = [0, 0], sizes = [8, 128], strides = [1, 1]} : vector<64x128xf32> to vector<8x128xf32>
    %36 = arith.truncf %31 : vector<8x32xf32> to vector<8x32xbf16>
    %cst_20 = arith.constant dense<0.000000e+00> : vector<8x128xf32>
    %37 = tpu.matmul %36, %14, %cst_20 {dimension_numbers = #tpu.dot_dimension_numbers<[1], [0], [0], [1], [0, 0, 1, 1], [], []>} : vector<8x32xbf16>, vector<32x128xbf16>, vector<8x128xf32> -> vector<8x128xf32>
    %38 = arith.addf %35, %37 : vector<8x128xf32>
    %39 = math.tanh %38 : vector<8x128xf32>
    %40 = arith.mulf %39, %8 : vector<8x128xf32>
    %41 = arith.addf %40, %11 : vector<8x128xf32>
    %42 = vector.extract_strided_slice %41 {offsets = [0, 0], sizes = [8, 32], strides = [1, 1]} : vector<8x128xf32> to vector<8x32xf32>
    %43 = vector.extract_strided_slice %41 {offsets = [0, 32], sizes = [8, 32], strides = [1, 1]} : vector<8x128xf32> to vector<8x32xf32>
    %44 = vector.extract_strided_slice %41 {offsets = [0, 64], sizes = [8, 32], strides = [1, 1]} : vector<8x128xf32> to vector<8x32xf32>
    %45 = vector.extract_strided_slice %41 {offsets = [0, 96], sizes = [8, 32], strides = [1, 1]} : vector<8x128xf32> to vector<8x32xf32>
    %46 = arith.mulf %43, %33 : vector<8x32xf32>
    %47 = arith.mulf %42, %44 : vector<8x32xf32>
    %48 = arith.addf %46, %47 : vector<8x32xf32>
    %49 = math.tanh %48 : vector<8x32xf32>
    %50 = arith.mulf %45, %49 : vector<8x32xf32>
    %51 = tpu.concatenate %50, %32 in 1 : vector<8x32xf32>, vector<8x32xf32> -> vector<8x64xf32>
    %52 = arith.truncf %51 : vector<8x64xf32> to vector<8x64xbf16>
    %cst_21 = arith.constant dense<0.000000e+00> : vector<8x128xf32>
    %53 = tpu.matmul %52, %27, %cst_21 {dimension_numbers = #tpu.dot_dimension_numbers<[1], [0], [0], [1], [0, 0, 1, 1], [], []>} : vector<8x64xbf16>, vector<64x128xbf16>, vector<8x128xf32> -> vector<8x128xf32>
    %54 = arith.addf %53, %30 : vector<8x128xf32>
    %55 = math.tanh %54 : vector<8x128xf32>
    %56 = arith.mulf %55, %8 : vector<8x128xf32>
    %57 = arith.addf %56, %11 : vector<8x128xf32>
    %58 = vector.extract_strided_slice %57 {offsets = [0, 0], sizes = [8, 32], strides = [1, 1]} : vector<8x128xf32> to vector<8x32xf32>
    %59 = vector.extract_strided_slice %57 {offsets = [0, 32], sizes = [8, 32], strides = [1, 1]} : vector<8x128xf32> to vector<8x32xf32>
    %60 = vector.extract_strided_slice %57 {offsets = [0, 64], sizes = [8, 32], strides = [1, 1]} : vector<8x128xf32> to vector<8x32xf32>
    %61 = vector.extract_strided_slice %57 {offsets = [0, 96], sizes = [8, 32], strides = [1, 1]} : vector<8x128xf32> to vector<8x32xf32>
    %62 = arith.mulf %59, %34 : vector<8x32xf32>
    %63 = arith.mulf %58, %60 : vector<8x32xf32>
    %64 = arith.addf %62, %63 : vector<8x32xf32>
    %65 = math.tanh %64 : vector<8x32xf32>
    %66 = arith.mulf %61, %65 : vector<8x32xf32>
    %67 = vector.extract_strided_slice %26 {offsets = [8, 0], sizes = [8, 128], strides = [1, 1]} : vector<64x128xf32> to vector<8x128xf32>
    %68 = arith.truncf %50 : vector<8x32xf32> to vector<8x32xbf16>
    %cst_22 = arith.constant dense<0.000000e+00> : vector<8x128xf32>
    %69 = tpu.matmul %68, %14, %cst_22 {dimension_numbers = #tpu.dot_dimension_numbers<[1], [0], [0], [1], [0, 0, 1, 1], [], []>} : vector<8x32xbf16>, vector<32x128xbf16>, vector<8x128xf32> -> vector<8x128xf32>
    %70 = arith.addf %67, %69 : vector<8x128xf32>
    %71 = math.tanh %70 : vector<8x128xf32>
    %72 = arith.mulf %71, %8 : vector<8x128xf32>
    %73 = arith.addf %72, %11 : vector<8x128xf32>
    %74 = vector.extract_strided_slice %73 {offsets = [0, 0], sizes = [8, 32], strides = [1, 1]} : vector<8x128xf32> to vector<8x32xf32>
    %75 = vector.extract_strided_slice %73 {offsets = [0, 32], sizes = [8, 32], strides = [1, 1]} : vector<8x128xf32> to vector<8x32xf32>
    %76 = vector.extract_strided_slice %73 {offsets = [0, 64], sizes = [8, 32], strides = [1, 1]} : vector<8x128xf32> to vector<8x32xf32>
    %77 = vector.extract_strided_slice %73 {offsets = [0, 96], sizes = [8, 32], strides = [1, 1]} : vector<8x128xf32> to vector<8x32xf32>
    %78 = arith.mulf %75, %48 : vector<8x32xf32>
    %79 = arith.mulf %74, %76 : vector<8x32xf32>
    %80 = arith.addf %78, %79 : vector<8x32xf32>
    %81 = math.tanh %80 : vector<8x32xf32>
    %82 = arith.mulf %77, %81 : vector<8x32xf32>
    %83 = tpu.concatenate %82, %66 in 1 : vector<8x32xf32>, vector<8x32xf32> -> vector<8x64xf32>
    %84 = arith.truncf %83 : vector<8x64xf32> to vector<8x64xbf16>
    %cst_23 = arith.constant dense<0.000000e+00> : vector<8x128xf32>
    %85 = tpu.matmul %84, %27, %cst_23 {dimension_numbers = #tpu.dot_dimension_numbers<[1], [0], [0], [1], [0, 0, 1, 1], [], []>} : vector<8x64xbf16>, vector<64x128xbf16>, vector<8x128xf32> -> vector<8x128xf32>
    %86 = arith.addf %85, %30 : vector<8x128xf32>
    %87 = math.tanh %86 : vector<8x128xf32>
    %88 = arith.mulf %87, %8 : vector<8x128xf32>
    %89 = arith.addf %88, %11 : vector<8x128xf32>
    %90 = vector.extract_strided_slice %89 {offsets = [0, 0], sizes = [8, 32], strides = [1, 1]} : vector<8x128xf32> to vector<8x32xf32>
    %91 = vector.extract_strided_slice %89 {offsets = [0, 32], sizes = [8, 32], strides = [1, 1]} : vector<8x128xf32> to vector<8x32xf32>
    %92 = vector.extract_strided_slice %89 {offsets = [0, 64], sizes = [8, 32], strides = [1, 1]} : vector<8x128xf32> to vector<8x32xf32>
    %93 = vector.extract_strided_slice %89 {offsets = [0, 96], sizes = [8, 32], strides = [1, 1]} : vector<8x128xf32> to vector<8x32xf32>
    %94 = arith.mulf %91, %64 : vector<8x32xf32>
    %95 = arith.mulf %90, %92 : vector<8x32xf32>
    %96 = arith.addf %94, %95 : vector<8x32xf32>
    %97 = math.tanh %96 : vector<8x32xf32>
    %98 = arith.mulf %93, %97 : vector<8x32xf32>
    %99 = vector.extract_strided_slice %26 {offsets = [16, 0], sizes = [8, 128], strides = [1, 1]} : vector<64x128xf32> to vector<8x128xf32>
    %100 = arith.truncf %82 : vector<8x32xf32> to vector<8x32xbf16>
    %cst_24 = arith.constant dense<0.000000e+00> : vector<8x128xf32>
    %101 = tpu.matmul %100, %14, %cst_24 {dimension_numbers = #tpu.dot_dimension_numbers<[1], [0], [0], [1], [0, 0, 1, 1], [], []>} : vector<8x32xbf16>, vector<32x128xbf16>, vector<8x128xf32> -> vector<8x128xf32>
    %102 = arith.addf %99, %101 : vector<8x128xf32>
    %103 = math.tanh %102 : vector<8x128xf32>
    %104 = arith.mulf %103, %8 : vector<8x128xf32>
    %105 = arith.addf %104, %11 : vector<8x128xf32>
    %106 = vector.extract_strided_slice %105 {offsets = [0, 0], sizes = [8, 32], strides = [1, 1]} : vector<8x128xf32> to vector<8x32xf32>
    %107 = vector.extract_strided_slice %105 {offsets = [0, 32], sizes = [8, 32], strides = [1, 1]} : vector<8x128xf32> to vector<8x32xf32>
    %108 = vector.extract_strided_slice %105 {offsets = [0, 64], sizes = [8, 32], strides = [1, 1]} : vector<8x128xf32> to vector<8x32xf32>
    %109 = vector.extract_strided_slice %105 {offsets = [0, 96], sizes = [8, 32], strides = [1, 1]} : vector<8x128xf32> to vector<8x32xf32>
    %110 = arith.mulf %107, %80 : vector<8x32xf32>
    %111 = arith.mulf %106, %108 : vector<8x32xf32>
    %112 = arith.addf %110, %111 : vector<8x32xf32>
    %113 = math.tanh %112 : vector<8x32xf32>
    %114 = arith.mulf %109, %113 : vector<8x32xf32>
    %115 = tpu.concatenate %114, %98 in 1 : vector<8x32xf32>, vector<8x32xf32> -> vector<8x64xf32>
    %116 = arith.truncf %115 : vector<8x64xf32> to vector<8x64xbf16>
    %cst_25 = arith.constant dense<0.000000e+00> : vector<8x128xf32>
    %117 = tpu.matmul %116, %27, %cst_25 {dimension_numbers = #tpu.dot_dimension_numbers<[1], [0], [0], [1], [0, 0, 1, 1], [], []>} : vector<8x64xbf16>, vector<64x128xbf16>, vector<8x128xf32> -> vector<8x128xf32>
    %118 = arith.addf %117, %30 : vector<8x128xf32>
    %119 = math.tanh %118 : vector<8x128xf32>
    %120 = arith.mulf %119, %8 : vector<8x128xf32>
    %121 = arith.addf %120, %11 : vector<8x128xf32>
    %122 = vector.extract_strided_slice %121 {offsets = [0, 0], sizes = [8, 32], strides = [1, 1]} : vector<8x128xf32> to vector<8x32xf32>
    %123 = vector.extract_strided_slice %121 {offsets = [0, 32], sizes = [8, 32], strides = [1, 1]} : vector<8x128xf32> to vector<8x32xf32>
    %124 = vector.extract_strided_slice %121 {offsets = [0, 64], sizes = [8, 32], strides = [1, 1]} : vector<8x128xf32> to vector<8x32xf32>
    %125 = vector.extract_strided_slice %121 {offsets = [0, 96], sizes = [8, 32], strides = [1, 1]} : vector<8x128xf32> to vector<8x32xf32>
    %126 = arith.mulf %123, %96 : vector<8x32xf32>
    %127 = arith.mulf %122, %124 : vector<8x32xf32>
    %128 = arith.addf %126, %127 : vector<8x32xf32>
    %129 = math.tanh %128 : vector<8x32xf32>
    %130 = arith.mulf %125, %129 : vector<8x32xf32>
    %131 = vector.extract_strided_slice %26 {offsets = [24, 0], sizes = [8, 128], strides = [1, 1]} : vector<64x128xf32> to vector<8x128xf32>
    %132 = arith.truncf %114 : vector<8x32xf32> to vector<8x32xbf16>
    %cst_26 = arith.constant dense<0.000000e+00> : vector<8x128xf32>
    %133 = tpu.matmul %132, %14, %cst_26 {dimension_numbers = #tpu.dot_dimension_numbers<[1], [0], [0], [1], [0, 0, 1, 1], [], []>} : vector<8x32xbf16>, vector<32x128xbf16>, vector<8x128xf32> -> vector<8x128xf32>
    %134 = arith.addf %131, %133 : vector<8x128xf32>
    %135 = math.tanh %134 : vector<8x128xf32>
    %136 = arith.mulf %135, %8 : vector<8x128xf32>
    %137 = arith.addf %136, %11 : vector<8x128xf32>
    %138 = vector.extract_strided_slice %137 {offsets = [0, 0], sizes = [8, 32], strides = [1, 1]} : vector<8x128xf32> to vector<8x32xf32>
    %139 = vector.extract_strided_slice %137 {offsets = [0, 32], sizes = [8, 32], strides = [1, 1]} : vector<8x128xf32> to vector<8x32xf32>
    %140 = vector.extract_strided_slice %137 {offsets = [0, 64], sizes = [8, 32], strides = [1, 1]} : vector<8x128xf32> to vector<8x32xf32>
    %141 = vector.extract_strided_slice %137 {offsets = [0, 96], sizes = [8, 32], strides = [1, 1]} : vector<8x128xf32> to vector<8x32xf32>
    %142 = arith.mulf %139, %112 : vector<8x32xf32>
    %143 = arith.mulf %138, %140 : vector<8x32xf32>
    %144 = arith.addf %142, %143 : vector<8x32xf32>
    %145 = math.tanh %144 : vector<8x32xf32>
    %146 = arith.mulf %141, %145 : vector<8x32xf32>
    %147 = tpu.concatenate %146, %130 in 1 : vector<8x32xf32>, vector<8x32xf32> -> vector<8x64xf32>
    %148 = arith.truncf %147 : vector<8x64xf32> to vector<8x64xbf16>
    %cst_27 = arith.constant dense<0.000000e+00> : vector<8x128xf32>
    %149 = tpu.matmul %148, %27, %cst_27 {dimension_numbers = #tpu.dot_dimension_numbers<[1], [0], [0], [1], [0, 0, 1, 1], [], []>} : vector<8x64xbf16>, vector<64x128xbf16>, vector<8x128xf32> -> vector<8x128xf32>
    %150 = arith.addf %149, %30 : vector<8x128xf32>
    %151 = math.tanh %150 : vector<8x128xf32>
    %152 = arith.mulf %151, %8 : vector<8x128xf32>
    %153 = arith.addf %152, %11 : vector<8x128xf32>
    %154 = vector.extract_strided_slice %153 {offsets = [0, 0], sizes = [8, 32], strides = [1, 1]} : vector<8x128xf32> to vector<8x32xf32>
    %155 = vector.extract_strided_slice %153 {offsets = [0, 32], sizes = [8, 32], strides = [1, 1]} : vector<8x128xf32> to vector<8x32xf32>
    %156 = vector.extract_strided_slice %153 {offsets = [0, 64], sizes = [8, 32], strides = [1, 1]} : vector<8x128xf32> to vector<8x32xf32>
    %157 = vector.extract_strided_slice %153 {offsets = [0, 96], sizes = [8, 32], strides = [1, 1]} : vector<8x128xf32> to vector<8x32xf32>
    %158 = arith.mulf %155, %128 : vector<8x32xf32>
    %159 = arith.mulf %154, %156 : vector<8x32xf32>
    %160 = arith.addf %158, %159 : vector<8x32xf32>
    %161 = math.tanh %160 : vector<8x32xf32>
    %162 = arith.mulf %157, %161 : vector<8x32xf32>
    %163 = vector.extract_strided_slice %26 {offsets = [32, 0], sizes = [8, 128], strides = [1, 1]} : vector<64x128xf32> to vector<8x128xf32>
    %164 = arith.truncf %146 : vector<8x32xf32> to vector<8x32xbf16>
    %cst_28 = arith.constant dense<0.000000e+00> : vector<8x128xf32>
    %165 = tpu.matmul %164, %14, %cst_28 {dimension_numbers = #tpu.dot_dimension_numbers<[1], [0], [0], [1], [0, 0, 1, 1], [], []>} : vector<8x32xbf16>, vector<32x128xbf16>, vector<8x128xf32> -> vector<8x128xf32>
    %166 = arith.addf %163, %165 : vector<8x128xf32>
    %167 = math.tanh %166 : vector<8x128xf32>
    %168 = arith.mulf %167, %8 : vector<8x128xf32>
    %169 = arith.addf %168, %11 : vector<8x128xf32>
    %170 = vector.extract_strided_slice %169 {offsets = [0, 0], sizes = [8, 32], strides = [1, 1]} : vector<8x128xf32> to vector<8x32xf32>
    %171 = vector.extract_strided_slice %169 {offsets = [0, 32], sizes = [8, 32], strides = [1, 1]} : vector<8x128xf32> to vector<8x32xf32>
    %172 = vector.extract_strided_slice %169 {offsets = [0, 64], sizes = [8, 32], strides = [1, 1]} : vector<8x128xf32> to vector<8x32xf32>
    %173 = vector.extract_strided_slice %169 {offsets = [0, 96], sizes = [8, 32], strides = [1, 1]} : vector<8x128xf32> to vector<8x32xf32>
    %174 = arith.mulf %171, %144 : vector<8x32xf32>
    %175 = arith.mulf %170, %172 : vector<8x32xf32>
    %176 = arith.addf %174, %175 : vector<8x32xf32>
    %177 = math.tanh %176 : vector<8x32xf32>
    %178 = arith.mulf %173, %177 : vector<8x32xf32>
    %179 = tpu.concatenate %178, %162 in 1 : vector<8x32xf32>, vector<8x32xf32> -> vector<8x64xf32>
    %180 = arith.truncf %179 : vector<8x64xf32> to vector<8x64xbf16>
    %cst_29 = arith.constant dense<0.000000e+00> : vector<8x128xf32>
    %181 = tpu.matmul %180, %27, %cst_29 {dimension_numbers = #tpu.dot_dimension_numbers<[1], [0], [0], [1], [0, 0, 1, 1], [], []>} : vector<8x64xbf16>, vector<64x128xbf16>, vector<8x128xf32> -> vector<8x128xf32>
    %182 = arith.addf %181, %30 : vector<8x128xf32>
    %183 = math.tanh %182 : vector<8x128xf32>
    %184 = arith.mulf %183, %8 : vector<8x128xf32>
    %185 = arith.addf %184, %11 : vector<8x128xf32>
    %186 = vector.extract_strided_slice %185 {offsets = [0, 0], sizes = [8, 32], strides = [1, 1]} : vector<8x128xf32> to vector<8x32xf32>
    %187 = vector.extract_strided_slice %185 {offsets = [0, 32], sizes = [8, 32], strides = [1, 1]} : vector<8x128xf32> to vector<8x32xf32>
    %188 = vector.extract_strided_slice %185 {offsets = [0, 64], sizes = [8, 32], strides = [1, 1]} : vector<8x128xf32> to vector<8x32xf32>
    %189 = vector.extract_strided_slice %185 {offsets = [0, 96], sizes = [8, 32], strides = [1, 1]} : vector<8x128xf32> to vector<8x32xf32>
    %190 = arith.mulf %187, %160 : vector<8x32xf32>
    %191 = arith.mulf %186, %188 : vector<8x32xf32>
    %192 = arith.addf %190, %191 : vector<8x32xf32>
    %193 = math.tanh %192 : vector<8x32xf32>
    %194 = arith.mulf %189, %193 : vector<8x32xf32>
    %195 = vector.extract_strided_slice %26 {offsets = [40, 0], sizes = [8, 128], strides = [1, 1]} : vector<64x128xf32> to vector<8x128xf32>
    %196 = arith.truncf %178 : vector<8x32xf32> to vector<8x32xbf16>
    %cst_30 = arith.constant dense<0.000000e+00> : vector<8x128xf32>
    %197 = tpu.matmul %196, %14, %cst_30 {dimension_numbers = #tpu.dot_dimension_numbers<[1], [0], [0], [1], [0, 0, 1, 1], [], []>} : vector<8x32xbf16>, vector<32x128xbf16>, vector<8x128xf32> -> vector<8x128xf32>
    %198 = arith.addf %195, %197 : vector<8x128xf32>
    %199 = math.tanh %198 : vector<8x128xf32>
    %200 = arith.mulf %199, %8 : vector<8x128xf32>
    %201 = arith.addf %200, %11 : vector<8x128xf32>
    %202 = vector.extract_strided_slice %201 {offsets = [0, 0], sizes = [8, 32], strides = [1, 1]} : vector<8x128xf32> to vector<8x32xf32>
    %203 = vector.extract_strided_slice %201 {offsets = [0, 32], sizes = [8, 32], strides = [1, 1]} : vector<8x128xf32> to vector<8x32xf32>
    %204 = vector.extract_strided_slice %201 {offsets = [0, 64], sizes = [8, 32], strides = [1, 1]} : vector<8x128xf32> to vector<8x32xf32>
    %205 = vector.extract_strided_slice %201 {offsets = [0, 96], sizes = [8, 32], strides = [1, 1]} : vector<8x128xf32> to vector<8x32xf32>
    %206 = arith.mulf %203, %176 : vector<8x32xf32>
    %207 = arith.mulf %202, %204 : vector<8x32xf32>
    %208 = arith.addf %206, %207 : vector<8x32xf32>
    %209 = math.tanh %208 : vector<8x32xf32>
    %210 = arith.mulf %205, %209 : vector<8x32xf32>
    %211 = tpu.concatenate %210, %194 in 1 : vector<8x32xf32>, vector<8x32xf32> -> vector<8x64xf32>
    %212 = arith.truncf %211 : vector<8x64xf32> to vector<8x64xbf16>
    %cst_31 = arith.constant dense<0.000000e+00> : vector<8x128xf32>
    %213 = tpu.matmul %212, %27, %cst_31 {dimension_numbers = #tpu.dot_dimension_numbers<[1], [0], [0], [1], [0, 0, 1, 1], [], []>} : vector<8x64xbf16>, vector<64x128xbf16>, vector<8x128xf32> -> vector<8x128xf32>
    %214 = arith.addf %213, %30 : vector<8x128xf32>
    %215 = math.tanh %214 : vector<8x128xf32>
    %216 = arith.mulf %215, %8 : vector<8x128xf32>
    %217 = arith.addf %216, %11 : vector<8x128xf32>
    %218 = vector.extract_strided_slice %217 {offsets = [0, 0], sizes = [8, 32], strides = [1, 1]} : vector<8x128xf32> to vector<8x32xf32>
    %219 = vector.extract_strided_slice %217 {offsets = [0, 32], sizes = [8, 32], strides = [1, 1]} : vector<8x128xf32> to vector<8x32xf32>
    %220 = vector.extract_strided_slice %217 {offsets = [0, 64], sizes = [8, 32], strides = [1, 1]} : vector<8x128xf32> to vector<8x32xf32>
    %221 = vector.extract_strided_slice %217 {offsets = [0, 96], sizes = [8, 32], strides = [1, 1]} : vector<8x128xf32> to vector<8x32xf32>
    %222 = arith.mulf %219, %192 : vector<8x32xf32>
    %223 = arith.mulf %218, %220 : vector<8x32xf32>
    %224 = arith.addf %222, %223 : vector<8x32xf32>
    %225 = math.tanh %224 : vector<8x32xf32>
    %226 = arith.mulf %221, %225 : vector<8x32xf32>
    %227 = vector.extract_strided_slice %26 {offsets = [48, 0], sizes = [8, 128], strides = [1, 1]} : vector<64x128xf32> to vector<8x128xf32>
    %228 = arith.truncf %210 : vector<8x32xf32> to vector<8x32xbf16>
    %cst_32 = arith.constant dense<0.000000e+00> : vector<8x128xf32>
    %229 = tpu.matmul %228, %14, %cst_32 {dimension_numbers = #tpu.dot_dimension_numbers<[1], [0], [0], [1], [0, 0, 1, 1], [], []>} : vector<8x32xbf16>, vector<32x128xbf16>, vector<8x128xf32> -> vector<8x128xf32>
    %230 = arith.addf %227, %229 : vector<8x128xf32>
    %231 = math.tanh %230 : vector<8x128xf32>
    %232 = arith.mulf %231, %8 : vector<8x128xf32>
    %233 = arith.addf %232, %11 : vector<8x128xf32>
    %234 = vector.extract_strided_slice %233 {offsets = [0, 0], sizes = [8, 32], strides = [1, 1]} : vector<8x128xf32> to vector<8x32xf32>
    %235 = vector.extract_strided_slice %233 {offsets = [0, 32], sizes = [8, 32], strides = [1, 1]} : vector<8x128xf32> to vector<8x32xf32>
    %236 = vector.extract_strided_slice %233 {offsets = [0, 64], sizes = [8, 32], strides = [1, 1]} : vector<8x128xf32> to vector<8x32xf32>
    %237 = vector.extract_strided_slice %233 {offsets = [0, 96], sizes = [8, 32], strides = [1, 1]} : vector<8x128xf32> to vector<8x32xf32>
    %238 = arith.mulf %235, %208 : vector<8x32xf32>
    %239 = arith.mulf %234, %236 : vector<8x32xf32>
    %240 = arith.addf %238, %239 : vector<8x32xf32>
    %241 = math.tanh %240 : vector<8x32xf32>
    %242 = arith.mulf %237, %241 : vector<8x32xf32>
    %243 = tpu.concatenate %242, %226 in 1 : vector<8x32xf32>, vector<8x32xf32> -> vector<8x64xf32>
    %244 = arith.truncf %243 : vector<8x64xf32> to vector<8x64xbf16>
    %cst_33 = arith.constant dense<0.000000e+00> : vector<8x128xf32>
    %245 = tpu.matmul %244, %27, %cst_33 {dimension_numbers = #tpu.dot_dimension_numbers<[1], [0], [0], [1], [0, 0, 1, 1], [], []>} : vector<8x64xbf16>, vector<64x128xbf16>, vector<8x128xf32> -> vector<8x128xf32>
    %246 = arith.addf %245, %30 : vector<8x128xf32>
    %247 = math.tanh %246 : vector<8x128xf32>
    %248 = arith.mulf %247, %8 : vector<8x128xf32>
    %249 = arith.addf %248, %11 : vector<8x128xf32>
    %250 = vector.extract_strided_slice %249 {offsets = [0, 0], sizes = [8, 32], strides = [1, 1]} : vector<8x128xf32> to vector<8x32xf32>
    %251 = vector.extract_strided_slice %249 {offsets = [0, 32], sizes = [8, 32], strides = [1, 1]} : vector<8x128xf32> to vector<8x32xf32>
    %252 = vector.extract_strided_slice %249 {offsets = [0, 64], sizes = [8, 32], strides = [1, 1]} : vector<8x128xf32> to vector<8x32xf32>
    %253 = vector.extract_strided_slice %249 {offsets = [0, 96], sizes = [8, 32], strides = [1, 1]} : vector<8x128xf32> to vector<8x32xf32>
    %254 = arith.mulf %251, %224 : vector<8x32xf32>
    %255 = arith.mulf %250, %252 : vector<8x32xf32>
    %256 = arith.addf %254, %255 : vector<8x32xf32>
    %257 = math.tanh %256 : vector<8x32xf32>
    %258 = arith.mulf %253, %257 : vector<8x32xf32>
    %259 = vector.extract_strided_slice %26 {offsets = [56, 0], sizes = [8, 128], strides = [1, 1]} : vector<64x128xf32> to vector<8x128xf32>
    %260 = arith.truncf %242 : vector<8x32xf32> to vector<8x32xbf16>
    %cst_34 = arith.constant dense<0.000000e+00> : vector<8x128xf32>
    %261 = tpu.matmul %260, %14, %cst_34 {dimension_numbers = #tpu.dot_dimension_numbers<[1], [0], [0], [1], [0, 0, 1, 1], [], []>} : vector<8x32xbf16>, vector<32x128xbf16>, vector<8x128xf32> -> vector<8x128xf32>
    %262 = arith.addf %259, %261 : vector<8x128xf32>
    %263 = math.tanh %262 : vector<8x128xf32>
    %264 = arith.mulf %263, %8 : vector<8x128xf32>
    %265 = arith.addf %264, %11 : vector<8x128xf32>
    %266 = vector.extract_strided_slice %265 {offsets = [0, 0], sizes = [8, 32], strides = [1, 1]} : vector<8x128xf32> to vector<8x32xf32>
    %267 = vector.extract_strided_slice %265 {offsets = [0, 32], sizes = [8, 32], strides = [1, 1]} : vector<8x128xf32> to vector<8x32xf32>
    %268 = vector.extract_strided_slice %265 {offsets = [0, 64], sizes = [8, 32], strides = [1, 1]} : vector<8x128xf32> to vector<8x32xf32>
    %269 = vector.extract_strided_slice %265 {offsets = [0, 96], sizes = [8, 32], strides = [1, 1]} : vector<8x128xf32> to vector<8x32xf32>
    %270 = arith.mulf %267, %240 : vector<8x32xf32>
    %271 = arith.mulf %266, %268 : vector<8x32xf32>
    %272 = arith.addf %270, %271 : vector<8x32xf32>
    %273 = math.tanh %272 : vector<8x32xf32>
    %274 = arith.mulf %269, %273 : vector<8x32xf32>
    %275 = tpu.concatenate %274, %258 in 1 : vector<8x32xf32>, vector<8x32xf32> -> vector<8x64xf32>
    %276 = arith.truncf %275 : vector<8x64xf32> to vector<8x64xbf16>
    %cst_35 = arith.constant dense<0.000000e+00> : vector<8x128xf32>
    %277 = tpu.matmul %276, %27, %cst_35 {dimension_numbers = #tpu.dot_dimension_numbers<[1], [0], [0], [1], [0, 0, 1, 1], [], []>} : vector<8x64xbf16>, vector<64x128xbf16>, vector<8x128xf32> -> vector<8x128xf32>
    %278 = arith.addf %277, %30 : vector<8x128xf32>
    %279 = math.tanh %278 : vector<8x128xf32>
    %280 = arith.mulf %279, %8 : vector<8x128xf32>
    %281 = arith.addf %280, %11 : vector<8x128xf32>
    %282 = vector.extract_strided_slice %281 {offsets = [0, 0], sizes = [8, 32], strides = [1, 1]} : vector<8x128xf32> to vector<8x32xf32>
    %283 = vector.extract_strided_slice %281 {offsets = [0, 32], sizes = [8, 32], strides = [1, 1]} : vector<8x128xf32> to vector<8x32xf32>
    %284 = vector.extract_strided_slice %281 {offsets = [0, 64], sizes = [8, 32], strides = [1, 1]} : vector<8x128xf32> to vector<8x32xf32>
    %285 = vector.extract_strided_slice %281 {offsets = [0, 96], sizes = [8, 32], strides = [1, 1]} : vector<8x128xf32> to vector<8x32xf32>
    %286 = arith.mulf %283, %256 : vector<8x32xf32>
    %287 = arith.mulf %282, %284 : vector<8x32xf32>
    %288 = arith.addf %286, %287 : vector<8x32xf32>
    %289 = math.tanh %288 : vector<8x32xf32>
    %290 = arith.mulf %285, %289 : vector<8x32xf32>
    %291 = tpu.iota {dimensions = array<i32: 1>} : vector<8x4xi32>
    %c0_36 = arith.constant 0 : index
    %c0_37 = arith.constant 0 : index
    %292 = vector.load %arg2[%c0_36, %c0_37] : memref<8x1xi32, #tpu.memory_space<vmem>>, vector<8x1xi32>
    %293 = vector.broadcast %292 : vector<8x1xi32> to vector<8x4xi32>
    %294 = arith.cmpi eq, %291, %293 : vector<8x4xi32>
    %295 = arith.extui %294 : vector<8x4xi1> to vector<8x4xi32>
    %296 = arith.sitofp %295 : vector<8x4xi32> to vector<8x4xf32>
    %297 = arith.truncf %296 : vector<8x4xf32> to vector<8x4xbf16>
    %c0_38 = arith.constant 0 : index
    %c0_39 = arith.constant 0 : index
    %298 = vector.load %arg3[%c0_38, %c0_39] : memref<8x8xf32, #tpu.memory_space<vmem>>, vector<8x8xf32>
    %299 = arith.truncf %298 : vector<8x8xf32> to vector<8x8xbf16>
    %c144 = arith.constant 144 : index
    %c0_40 = arith.constant 0 : index
    %300 = vector.load %arg4[%c144, %c0_40] : memref<336x128xbf16, #tpu.memory_space<vmem>>, vector<8x32xbf16>
    %cst_41 = arith.constant dense<0.000000e+00> : vector<8x32xf32>
    %301 = tpu.matmul %299, %300, %cst_41 {dimension_numbers = #tpu.dot_dimension_numbers<[1], [0], [0], [1], [0, 0, 1, 1], [], []>} : vector<8x8xbf16>, vector<8x32xbf16>, vector<8x32xf32> -> vector<8x32xf32>
    %c160 = arith.constant 160 : index
    %c0_42 = arith.constant 0 : index
    %302 = vector.load %arg4[%c160, %c0_42] : memref<336x128xbf16, #tpu.memory_space<vmem>>, vector<4x32xbf16>
    %cst_43 = arith.constant dense<0.000000e+00> : vector<8x32xf32>
    %303 = tpu.matmul %297, %302, %cst_43 {dimension_numbers = #tpu.dot_dimension_numbers<[1], [0], [0], [1], [0, 0, 1, 1], [], []>} : vector<8x4xbf16>, vector<4x32xbf16>, vector<8x32xf32> -> vector<8x32xf32>
    %304 = arith.addf %301, %303 : vector<8x32xf32>
    %c3 = arith.constant 3 : index
    %c0_44 = arith.constant 0 : index
    %305 = vector.load %arg5[%c3, %c0_44] : memref<8x128xf32, #tpu.memory_space<vmem>>, vector<1x32xf32>
    %306 = vector.broadcast %305 : vector<1x32xf32> to vector<8x32xf32>
    %307 = arith.addf %304, %306 : vector<8x32xf32>
    %308 = tpu.concatenate %307, %274 in 1 : vector<8x32xf32>, vector<8x32xf32> -> vector<8x64xf32>
    %309 = arith.truncf %308 : vector<8x64xf32> to vector<8x64xbf16>
    %c176 = arith.constant 176 : index
    %c0_45 = arith.constant 0 : index
    %310 = vector.load %arg4[%c176, %c0_45] : memref<336x128xbf16, #tpu.memory_space<vmem>>, vector<64x128xbf16>
    %cst_46 = arith.constant dense<0.000000e+00> : vector<8x128xf32>
    %311 = tpu.matmul %309, %310, %cst_46 {dimension_numbers = #tpu.dot_dimension_numbers<[1], [0], [0], [1], [0, 0, 1, 1], [], []>} : vector<8x64xbf16>, vector<64x128xbf16>, vector<8x128xf32> -> vector<8x128xf32>
    %c4 = arith.constant 4 : index
    %c0_47 = arith.constant 0 : index
    %312 = vector.load %arg5[%c4, %c0_47] : memref<8x128xf32, #tpu.memory_space<vmem>>, vector<1x128xf32>
    %313 = vector.broadcast %312 : vector<1x128xf32> to vector<8x128xf32>
    %314 = arith.addf %311, %313 : vector<8x128xf32>
    %315 = math.tanh %314 : vector<8x128xf32>
    %316 = arith.mulf %315, %8 : vector<8x128xf32>
    %317 = arith.addf %316, %11 : vector<8x128xf32>
    %318 = vector.extract_strided_slice %317 {offsets = [0, 0], sizes = [8, 32], strides = [1, 1]} : vector<8x128xf32> to vector<8x32xf32>
    %319 = vector.extract_strided_slice %317 {offsets = [0, 64], sizes = [8, 32], strides = [1, 1]} : vector<8x128xf32> to vector<8x32xf32>
    %320 = vector.extract_strided_slice %317 {offsets = [0, 96], sizes = [8, 32], strides = [1, 1]} : vector<8x128xf32> to vector<8x32xf32>
    %321 = arith.mulf %318, %319 : vector<8x32xf32>
    %322 = math.tanh %321 : vector<8x32xf32>
    %323 = arith.mulf %320, %322 : vector<8x32xf32>
    %324 = tpu.concatenate %323, %290 in 1 : vector<8x32xf32>, vector<8x32xf32> -> vector<8x64xf32>
    %325 = arith.truncf %324 : vector<8x64xf32> to vector<8x64xbf16>
    %c240 = arith.constant 240 : index
    %c0_48 = arith.constant 0 : index
    %326 = vector.load %arg4[%c240, %c0_48] : memref<336x128xbf16, #tpu.memory_space<vmem>>, vector<64x128xbf16>
    %cst_49 = arith.constant dense<0.000000e+00> : vector<8x128xf32>
    %327 = tpu.matmul %325, %326, %cst_49 {dimension_numbers = #tpu.dot_dimension_numbers<[1], [0], [0], [1], [0, 0, 1, 1], [], []>} : vector<8x64xbf16>, vector<64x128xbf16>, vector<8x128xf32> -> vector<8x128xf32>
    %c5 = arith.constant 5 : index
    %c0_50 = arith.constant 0 : index
    %328 = vector.load %arg5[%c5, %c0_50] : memref<8x128xf32, #tpu.memory_space<vmem>>, vector<1x128xf32>
    %329 = vector.broadcast %328 : vector<1x128xf32> to vector<8x128xf32>
    %330 = arith.addf %327, %329 : vector<8x128xf32>
    %331 = math.tanh %330 : vector<8x128xf32>
    %332 = arith.mulf %331, %8 : vector<8x128xf32>
    %333 = arith.addf %332, %11 : vector<8x128xf32>
    %334 = vector.extract_strided_slice %333 {offsets = [0, 0], sizes = [8, 32], strides = [1, 1]} : vector<8x128xf32> to vector<8x32xf32>
    %335 = vector.extract_strided_slice %333 {offsets = [0, 64], sizes = [8, 32], strides = [1, 1]} : vector<8x128xf32> to vector<8x32xf32>
    %336 = vector.extract_strided_slice %333 {offsets = [0, 96], sizes = [8, 32], strides = [1, 1]} : vector<8x128xf32> to vector<8x32xf32>
    %337 = arith.mulf %334, %335 : vector<8x32xf32>
    %338 = math.tanh %337 : vector<8x32xf32>
    %339 = arith.mulf %336, %338 : vector<8x32xf32>
    %340 = arith.truncf %339 : vector<8x32xf32> to vector<8x32xbf16>
    %c304 = arith.constant 304 : index
    %c0_51 = arith.constant 0 : index
    %341 = vector.load %arg4[%c304, %c0_51] : memref<336x128xbf16, #tpu.memory_space<vmem>>, vector<32x128xbf16>
    %cst_52 = arith.constant dense<0.000000e+00> : vector<8x128xf32>
    %342 = tpu.matmul %340, %341, %cst_52 {dimension_numbers = #tpu.dot_dimension_numbers<[1], [0], [0], [1], [0, 0, 1, 1], [], []>} : vector<8x32xbf16>, vector<32x128xbf16>, vector<8x128xf32> -> vector<8x128xf32>
    %c6 = arith.constant 6 : index
    %c0_53 = arith.constant 0 : index
    %343 = vector.load %arg5[%c6, %c0_53] : memref<8x128xf32, #tpu.memory_space<vmem>>, vector<1x128xf32>
    %344 = vector.broadcast %343 : vector<1x128xf32> to vector<8x128xf32>
    %345 = arith.addf %342, %344 : vector<8x128xf32>
    %346 = tpu.iota {dimensions = array<i32: 1>} : vector<8x128xi32>
    %c9_i32 = arith.constant 9 : i32
    %347 = vector.broadcast %c9_i32 : i32 to vector<8x128xi32>
    %348 = arith.cmpi eq, %346, %347 : vector<8x128xi32>
    %349 = arith.negf %345 : vector<8x128xf32>
    %350 = math.exp %349 : vector<8x128xf32>
    %cst_54 = arith.constant 1.000000e+00 : f32
    %351 = vector.broadcast %cst_54 : f32 to vector<8x128xf32>
    %352 = arith.addf %351, %350 : vector<8x128xf32>
    %353 = arith.divf %351, %352 : vector<8x128xf32>
    %354 = arith.select %348, %353, %345 : vector<8x128xi1>, vector<8x128xf32>
    %c0_55 = arith.constant 0 : index
    %c0_56 = arith.constant 0 : index
    %355 = vector.load %arg6[%c0_55, %c0_56] : memref<8x128xf32, #tpu.memory_space<vmem>>, vector<8x128xf32>
    tpu.vector_store %arg6[%c0_55, %c0_56], %354 {strides = array<i32>} : memref<8x128xf32, #tpu.memory_space<vmem>>, vector<8x128xf32>,
    return
  }
  func.func @transform_0(%arg0: i32) -> (i32, i32, i32) {
    %c0_i32 = arith.constant 0 : i32
    %c0_i32_0 = arith.constant 0 : i32
    %c0_i32_1 = arith.constant 0 : i32
    return %c0_i32, %arg0, %c0_i32_0 : i32, i32, i32
  }
  func.func @transform_1(%arg0: i32) -> (i32, i32) {
    %c0_i32 = arith.constant 0 : i32
    %c0_i32_0 = arith.constant 0 : i32
    return %arg0, %c0_i32 : i32, i32
  }
  func.func @transform_2(%arg0: i32) -> (i32, i32) {
    %c0_i32 = arith.constant 0 : i32
    %c0_i32_0 = arith.constant 0 : i32
    return %arg0, %c0_i32 : i32, i32
  }
  func.func @transform_3(%arg0: i32) -> (i32, i32) {
    %c0_i32 = arith.constant 0 : i32
    %c0_i32_0 = arith.constant 0 : i32
    %c0_i32_1 = arith.constant 0 : i32
    return %c0_i32, %c0_i32_0 : i32, i32
  }
  func.func @transform_4(%arg0: i32) -> (i32, i32) {
    %c0_i32 = arith.constant 0 : i32
    %c0_i32_0 = arith.constant 0 : i32
    %c0_i32_1 = arith.constant 0 : i32
    return %c0_i32, %c0_i32_0 : i32, i32
  }
  func.func @transform_5(%arg0: i32) -> (i32, i32) {
    %c0_i32 = arith.constant 0 : i32
    %c0_i32_0 = arith.constant 0 : i32
    return %arg0, %c0_i32 : i32, i32
  }
}

</mosaic_0001>

<llo_original>
// kernel: mind_model_forward.1
$region0: #{mind_model_forward.1}
  #allocation0 [shape = 'u32[]', space=smem, size = 0x4, offset = 0x4, fixed_abs, tag = 'smem constant byte address 0x4 - core index']
  #allocation1 [shape = 'u32[144,128]{1,0:T(1,128)}', space=vmem, size = 0x12000, scoped, tag = 'internal scratch']
  %s0 = inlined_call_operand.vmem [shape: f32[8,8,8], index: 0, kind: input, shape index: {}]
  %s1 = inlined_call_operand.vmem [shape: s32[8,1], index: 1, kind: input, shape index: {}]
  %s2 = inlined_call_operand.vmem [shape: f32[8,8], index: 2, kind: input, shape index: {}]
  %s3 = inlined_call_operand.hbm [shape: bf16[336,128], index: 3, kind: input, shape index: {}]
  %s4 = inlined_call_operand.vmem [shape: f32[8,128], index: 4, kind: input, shape index: {}]
  %s5 = inlined_call_operand.vmem [shape: f32[8,128], index: 5, kind: output, shape index: {}]
  %s6 = sld [smem:[#allocation0]]
  $region34: #{mind_model_forward.1} parent=0
    _
  %s8 = ssub.s32 1, %s6
  %s9 = scalar_select 0, %s8, %s6
  $region1: #{mind_model_forward.1} parent=0
    #allocation2 [shape = 'u8[86016]{0}', space=vmem, size = 0x15000, scoped, tag = 'input window, operand 3, single buffered']
    #allocation3 [shape = 's32[1]{0}', space=sflag, size = 0x4, scoped, tag = 'scoped memory for mind_model_forward.1']
    %10 = vsyncpa [#allocation3], 0
    // Predicated region
    $region2: #{mind_model_forward.1} parent=1 // pred_check
      _
    $region3: #{mind_model_forward.1} parent=1 // pred_check_branch
      %12 = sbr.rel (0) target = $region5
    $region4: #{mind_model_forward.1} parent=1 // pred_region
      _
    $region5: #{mind_model_forward.1} parent=1 // pred_fallthru
      _
    // Predicated region
    $region6: #{mind_model_forward.1} parent=1 // pred_check
      _
    $region7: #{mind_model_forward.1} parent=1 // pred_check_branch
      %14 = sbr.rel (0) target = $region9
    $region8: #{mind_model_forward.1} parent=1 // pred_region
      _
    $region9: #{mind_model_forward.1} parent=1 // pred_fallthru
      _
    // Predicated region
    $region10: #{mind_model_forward.1} parent=1 // pred_check
      _
    $region11: #{mind_model_forward.1} parent=1 // pred_check_branch
      %16 = sbr.rel (0) target = $region13
    $region12: #{mind_model_forward.1} parent=1 // pred_region
      _
    $region13: #{mind_model_forward.1} parent=1 // pred_fallthru
      _
    // Predicated region
    $region14: #{mind_model_forward.1} parent=1 // pred_check
      _
    $region15: #{mind_model_forward.1} parent=1 // pred_check_branch
      %18 = sbr.rel (0) target = $region17
    $region16: #{mind_model_forward.1} parent=1 // pred_region
      %s20 = ssub.s32 2688, 2688
      %21 = vsyncadd [#allocation3], %s20
      %s22 = sshll.u32 [#allocation2], 4
      %s23 = int_to_ptr.vmem [resolvable:$true] %s22
      %28 = dma.hbm_to_vmem [thread:$0]  %s3, 2688, %s23, [#allocation3], 64, 64, 4
    $region17: #{mind_model_forward.1} parent=1 // pred_fallthru
      _
    // Predicated region
    $region18: #{mind_model_forward.1} parent=1 // pred_check
      _
    $region19: #{mind_model_forward.1} parent=1 // pred_check_branch
      %30 = sbr.rel (0) target = $region21
    $region20: #{mind_model_forward.1} parent=1 // pred_region
      _
    $region21: #{mind_model_forward.1} parent=1 // pred_fallthru
      _
    // Predicated region
    $region22: #{mind_model_forward.1} parent=1 // pred_check
      _
    $region23: #{mind_model_forward.1} parent=1 // pred_check_branch
      %32 = sbr.rel (0) target = $region25
    $region24: #{mind_model_forward.1} parent=1 // pred_region
      %33 = dma.done [#allocation3], 2688
    $region25: #{mind_model_forward.1} parent=1 // pred_fallthru
      _
    %v35 = vlaneseq
    %v36 = vand.u32 %v35, 127
    %vm37 = vcmp.ge.s32.totalorder %v36, 64
    %vm38 = vcmp.lt.s32.totalorder %v36, 96
    %vm39 = vmand %vm37, %vm38
    %v40 = vsel %vm39, 1.0, 0.5
    %v41 = vsel %vm39, 0.0, 0.5
    %v42 = vld [vmem:[#allocation2] sm:$0xf]
    %v43 = vld [vmem:[#allocation2 + $0x8] sm:$0xf]
    %v44 = vld [vmem:[#allocation2 + $0xc] sm:$0xf]
    %v45 = vld [vmem:[#allocation2 + $0x10] sm:$0xf]
    %v46 = vld [vmem:[#allocation2 + $0x14] sm:$0xf]
    %v47 = vld [vmem:[#allocation2 + $0x18] sm:$0xf]
    %v48 = vld [vmem:[#allocation2 + $0x1c] sm:$0xf]
    %v49 = vld [vmem:[#allocation2 + $0x20] sm:$0xf]
    %v50 = vld [vmem:[#allocation2 + $0x24] sm:$0xf]
    %v51 = vld [vmem:[%s0] sm:$0xff]
    %v52 = vld [vmem:[%s0 + $0x8] sm:$0xff]
    %v53 = vld [vmem:[%s0 + $0x10] sm:$0xff]
    %v54 = vld [vmem:[%s0 + $0x18] sm:$0xff]
    %v55 = vld [vmem:[%s0 + $0x20] sm:$0xff]
    %v56 = vld [vmem:[%s0 + $0x28] sm:$0xff]
    %v57 = vld [vmem:[%s0 + $0x30] sm:$0xff]
    %v58 = vld [vmem:[%s0 + $0x38] sm:$0xff]
    %v59 = vpack.c.bf16 %v52, %v51
    %v60 = vpack.c.bf16 %v54, %v53
    %v61 = vpack.c.bf16 %v56, %v55
    %v62 = vpack.c.bf16 %v58, %v57
    %v63 = vld [vmem:[%s4] sm:$0x1]
    %v64 = vlaneseq
    %v65 = vshrl.u32 %v64, 7
    %v66 = vsub.s32 0, %v65
    %v67 = vrot.slane %v63, %v66
    %vm68 = vcmask 64512
    %v70 = vsel %vm68, %v59, 0
    %v73 = vsel %vm68, %v60, 0
    %v76 = vsel %vm68, %v61, 0
    %v79 = vsel %vm68, %v62, 0
    %vm81 = vcmask 1043456
    %v83 = vsel %vm81, %v42, 0
    %85 = vmatprep.subr.bf16.mxu0 0
    %86 = vmatpush1.bf16.msra.mxu0 0
    %87 = vmatprep.subr.bf16.mxu0 0
    %88 = vmatpush1.bf16.msra.mxu0 0
    %89 = vmatprep.subr.bf16.mxu0 0
    %90 = vmatpush1.bf16.msra.mxu0 0
    %91 = vmatprep.subr.bf16.mxu0 0
    %92 = vmatpush1.bf16.msra.mxu0 0
    %93 = vmatprep.subr.bf16.mxu0 0
    %94 = vmatpush1.bf16.msra.mxu0 0
    %95 = vmatprep.subr.bf16.mxu0 0
    %96 = vmatpush1.bf16.msra.mxu0 0
    %97 = vmatprep.subr.bf16.mxu0 0
    %98 = vmatpush1.bf16.msra.mxu0 0
    %99 = vmatprep.subr.bf16.mxu0 0
    %100 = vmatpush1.bf16.msra.mxu0 %v83
    %101 = vmatprep.subr.bf16.mxu0 0
    %102 = vmatpush2.bf16.msra.mxu0 0
    %103 = vmatprep.subr.bf16.mxu0 0
    %104 = vmatpush2.bf16.msra.mxu0 0
    %105 = vmatprep.subr.bf16.mxu0 0
    %106 = vmatpush2.bf16.msra.mxu0 0
    %107 = vmatprep.subr.bf16.mxu0 0
    %108 = vmatpush2.bf16.msra.mxu0 0
    %109 = vmatprep.subr.bf16.mxu0 0
    %110 = vmatpush2.bf16.msra.mxu0 0
    %111 = vmatprep.subr.bf16.mxu0 0
    %112 = vmatpush2.bf16.msra.mxu0 0
    %113 = vmatprep.subr.bf16.mxu0 0
    %114 = vmatpush2.bf16.msra.mxu0 0
    %115 = vmatprep.subr.bf16.mxu0 0
    %116 = vmatpush2.bf16.msra.mxu0 0
    %117 = vmatprep.mubr.bf16.mxu0 0
    %118 = vmatmul.mubr.bf16.gmra.mxu0 %v70
    %v119 = vpop.f32.mrf.mxu0
    %v120 = vadd.f32 %v67, %v119
    %v121 = vpop.f32.mrf.mxu0
    %v122 = vpop.f32.mrf.mxu0
    %v123 = vadd.f32 %v67, %v122
    %v124 = vpop.f32.mrf.mxu0
    %125 = vmatprep.mubr.bf16.mxu0 0
    %126 = vmatmul.mubr.bf16.gmra.mxu0 %v73
    %v127 = vpop.f32.mrf.mxu0
    %v128 = vadd.f32 %v67, %v127
    %v129 = vpop.f32.mrf.mxu0
    %v130 = vpop.f32.mrf.mxu0
    %v131 = vadd.f32 %v67, %v130
    %v132 = vpop.f32.mrf.mxu0
    %133 = vmatprep.mubr.bf16.mxu0 0
    %134 = vmatmul.mubr.bf16.gmra.mxu0 %v76
    %v135 = vpop.f32.mrf.mxu0
    %v136 = vadd.f32 %v67, %v135
    %v137 = vpop.f32.mrf.mxu0
    %v138 = vpop.f32.mrf.mxu0
    %v139 = vadd.f32 %v67, %v138
    %v140 = vpop.f32.mrf.mxu0
    %141 = vmatprep.mubr.bf16.mxu0 0
    %142 = vmatmul.mubr.bf16.gmra.mxu0 %v79
    %v143 = vpop.f32.mrf.mxu0
    %v144 = vadd.f32 %v67, %v143
    %v145 = vpop.f32.mrf.mxu0
    %v146 = vpop.f32.mrf.mxu0
    %v147 = vadd.f32 %v67, %v146
    %v148 = vpop.f32.mrf.mxu0
    %149 = vdwg.mxu0
    %v150 = vpack.c.bf16 %v123, %v120
    %v151 = vpack.c.bf16 %v131, %v128
    %v152 = vpack.c.bf16 %v139, %v136
    %v153 = vpack.c.bf16 %v147, %v144
    %v154 = vld [vmem:[%s4 + $0x1] sm:$0x1]
    %v155 = vlaneseq
    %v156 = vshrl.u32 %v155, 7
    %v157 = vsub.s32 0, %v156
    %v158 = vrot.slane %v154, %v157
    %v163 = vunpack.c.l.b16 %v43
    %v164 = vunpack.c.l.b16 %v44
    %v165 = vunpack.c.l.b16 %v45
    %v166 = vunpack.c.l.b16 %v46
    %v167 = vpack.c.b16 %v164, %v163
    %v168 = vpack.c.b16 %v166, %v165
    %vm171 = vcmask 261120
    %v173 = vsel %vm171, %v150, 0
    %v176 = vsel %vm171, %v151, 0
    %v179 = vsel %vm171, %v152, 0
    %v182 = vsel %vm171, %v153, 0
    %184 = vmatprep.subr.bf16.mxu0 0
    %185 = vmatpush1.bf16.msra.mxu0 0
    %186 = vmatprep.subr.bf16.mxu0 0
    %187 = vmatpush1.bf16.msra.mxu0 0
    %188 = vmatprep.subr.bf16.mxu0 0
    %189 = vmatpush1.bf16.msra.mxu0 0
    %190 = vmatprep.subr.bf16.mxu0 0
    %191 = vmatpush1.bf16.msra.mxu0 0
    %192 = vmatprep.subr.bf16.mxu0 0
    %193 = vmatpush1.bf16.msra.mxu0 0
    %194 = vmatprep.subr.bf16.mxu0 0
    %195 = vmatpush1.bf16.msra.mxu0 0
    %196 = vmatprep.subr.bf16.mxu0 0
    %197 = vmatpush1.bf16.msra.mxu0 %v168
    %198 = vmatprep.subr.bf16.mxu0 0
    %199 = vmatpush1.bf16.msra.mxu0 %v167
    %200 = vmatprep.subr.bf16.mxu0 0
    %201 = vmatpush2.bf16.msra.mxu0 0
    %202 = vmatprep.subr.bf16.mxu0 0
    %203 = vmatpush2.bf16.msra.mxu0 0
    %204 = vmatprep.subr.bf16.mxu0 0
    %205 = vmatpush2.bf16.msra.mxu0 0
    %206 = vmatprep.subr.bf16.mxu0 0
    %207 = vmatpush2.bf16.msra.mxu0 0
    %208 = vmatprep.subr.bf16.mxu0 0
    %209 = vmatpush2.bf16.msra.mxu0 0
    %210 = vmatprep.subr.bf16.mxu0 0
    %211 = vmatpush2.bf16.msra.mxu0 0
    %212 = vmatprep.subr.bf16.mxu0 0
    %213 = vmatpush2.bf16.msra.mxu0 0
    %214 = vmatprep.subr.bf16.mxu0 0
    %215 = vmatpush2.bf16.msra.mxu0 0
    %216 = vmatprep.mubr.bf16.mxu0 0
    %217 = vmatmul.mubr.bf16.gmra.mxu0 %v173
    %v218 = vpop.f32.mrf.mxu0
    %v219 = vadd.f32 %v158, %v218
    %v220 = vpop.f32.mrf.mxu0
    %v221 = vpop.f32.mrf.mxu0
    %v222 = vadd.f32 %v158, %v221
    %v223 = vpop.f32.mrf.mxu0
    %224 = vmatprep.mubr.bf16.mxu0 0
    %225 = vmatmul.mubr.bf16.gmra.mxu0 %v176
    %v226 = vpop.f32.mrf.mxu0
    %v227 = vadd.f32 %v158, %v226
    %v228 = vpop.f32.mrf.mxu0
    %v229 = vpop.f32.mrf.mxu0
    %v230 = vadd.f32 %v158, %v229
    %v231 = vpop.f32.mrf.mxu0
    %232 = vmatprep.mubr.bf16.mxu0 0
    %233 = vmatmul.mubr.bf16.gmra.mxu0 %v179
    %v234 = vpop.f32.mrf.mxu0
    %v235 = vadd.f32 %v158, %v234
    %v236 = vpop.f32.mrf.mxu0
    %v237 = vpop.f32.mrf.mxu0
    %v238 = vadd.f32 %v158, %v237
    %v239 = vpop.f32.mrf.mxu0
    %240 = vmatprep.mubr.bf16.mxu0 0
    %241 = vmatmul.mubr.bf16.gmra.mxu0 %v182
    %v242 = vpop.f32.mrf.mxu0
    %v243 = vadd.f32 %v158, %v242
    %v244 = vpop.f32.mrf.mxu0
    %v245 = vpop.f32.mrf.mxu0
    %v246 = vadd.f32 %v158, %v245
    %v247 = vpop.f32.mrf.mxu0
    %248 = vdwg.mxu0
    %v249 = vld [vmem:[#allocation2 + $0x28] sm:$0xf]
    %v250 = vld [vmem:[#allocation2 + $0x2c] sm:$0xf]
    %v251 = vld [vmem:[#allocation2 + $0x30] sm:$0xf]
    %v252 = vld [vmem:[#allocation2 + $0x34] sm:$0xf]
    %v253 = vld [vmem:[#allocation2 + $0x38] sm:$0xf]
    %v254 = vld [vmem:[#allocation2 + $0x3c] sm:$0xf]
    %v255 = vld [vmem:[#allocation2 + $0x40] sm:$0xf]
    %v256 = vld [vmem:[#allocation2 + $0x44] sm:$0xf]
    %v257 = vld [vmem:[%s4 + $0x2] sm:$0x1]
    %v258 = vlaneseq
    %v259 = vshrl.u32 %v258, 7
    %v260 = vsub.s32 0, %v259
    %v261 = vrot.slane %v257, %v260
    %v266 = vunpack.c.l.b16 %v47
    %v267 = vunpack.c.l.b16 %v48
    %v268 = vunpack.c.l.b16 %v49
    %v269 = vunpack.c.l.b16 %v50
    %v270 = vpack.c.b16 %v267, %v266
    %v271 = vpack.c.b16 %v269, %v268
    %v275 = vsel %vm171, 0, 0
    %277 = vmatprep.subr.bf16.mxu0 0
    %278 = vmatpush1.bf16.msra.mxu0 0
    %279 = vmatprep.subr.bf16.mxu0 0
    %280 = vmatpush1.bf16.msra.mxu0 0
    %281 = vmatprep.subr.bf16.mxu0 0
    %282 = vmatpush1.bf16.msra.mxu0 0
    %283 = vmatprep.subr.bf16.mxu0 0
    %284 = vmatpush1.bf16.msra.mxu0 0
    %285 = vmatprep.subr.bf16.mxu0 0
    %286 = vmatpush1.bf16.msra.mxu0 0
    %287 = vmatprep.subr.bf16.mxu0 0
    %288 = vmatpush1.bf16.msra.mxu0 0
    %289 = vmatprep.subr.bf16.mxu0 0
    %290 = vmatpush1.bf16.msra.mxu0 %v271
    %291 = vmatprep.subr.bf16.mxu0 0
    %292 = vmatpush1.bf16.msra.mxu0 %v270
    %293 = vmatprep.subr.bf16.mxu0 0
    %294 = vmatpush2.bf16.msra.mxu0 0
    %295 = vmatprep.subr.bf16.mxu0 0
    %296 = vmatpush2.bf16.msra.mxu0 0
    %297 = vmatprep.subr.bf16.mxu0 0
    %298 = vmatpush2.bf16.msra.mxu0 0
    %299 = vmatprep.subr.bf16.mxu0 0
    %300 = vmatpush2.bf16.msra.mxu0 0
    %301 = vmatprep.subr.bf16.mxu0 0
    %302 = vmatpush2.bf16.msra.mxu0 0
    %303 = vmatprep.subr.bf16.mxu0 0
    %304 = vmatpush2.bf16.msra.mxu0 0
    %305 = vmatprep.subr.bf16.mxu0 0
    %306 = vmatpush2.bf16.msra.mxu0 0
    %307 = vmatprep.subr.bf16.mxu0 0
    %308 = vmatpush2.bf16.msra.mxu0 0
    %309 = vmatprep.mubr.bf16.mxu0 0
    %310 = vmatmul.mubr.bf16.gmra.mxu0 %v275
    %v311 = vpop.f32.mrf.mxu0
    %v312 = vadd.f32 0.0, %v311
    %v313 = vpop.f32.mrf.mxu0
    %v314 = vpop.f32.mrf.mxu0
    %v315 = vpop.f32.mrf.mxu0
    %316 = vdwg.mxu0
    %v317 = vadd.f32 %v219, %v312
    %v318 = vtanh.pop %v317
    %v319 = vmul.f32 %v318, %v40
    %v320 = vadd.f32 %v319, %v41
    %v321 = vmul.f32 %v320, 0.0
    %323 = vrot.lane.b32.xlu0 %v320, 64
    %v324 = vpop.permute.xlu0 %323
    %v326 = vmul.f32 %v320, %v324
    %328 = vrot.lane.b32.xlu0 %v326, 32
    %v329 = vpop.permute.xlu0 %328
    %v331 = vadd.f32 %v321, %v329
    %v332 = vtanh.pop %v331
    %334 = vrot.lane.b32.xlu0 %v332, 64
    %v335 = vpop.permute.xlu0 %334
    %v337 = vmul.f32 %v320, %v335
    %339 = vrot.lane.b32.xlu0 %v337, 32
    %v340 = vpop.permute.xlu0 %339
    %v342 = vsel %vm171, %v340, 0.0
    %v343 = vpack.c.bf16 %v342, %v342
    %v352 = vunpack.c.l.b16 %v249
    %v353 = vunpack.c.l.b16 %v250
    %v354 = vunpack.c.l.b16 %v251
    %v355 = vunpack.c.l.b16 %v252
    %v356 = vunpack.c.l.b16 %v253
    %v357 = vunpack.c.l.b16 %v254
    %v358 = vunpack.c.l.b16 %v255
    %v359 = vunpack.c.l.b16 %v256
    %v360 = vpack.c.b16 %v353, %v352
    %v361 = vpack.c.b16 %v355, %v354
    %v362 = vpack.c.b16 %v357, %v356
    %v363 = vpack.c.b16 %v359, %v358
    %vm368 = vcmask 523264
    %v370 = vsel %vm368, %v343, 0
    %372 = vmatprep.subr.bf16.mxu0 0
    %373 = vmatpush1.bf16.msra.mxu0 0
    %374 = vmatprep.subr.bf16.mxu0 0
    %375 = vmatpush1.bf16.msra.mxu0 0
    %376 = vmatprep.subr.bf16.mxu0 0
    %377 = vmatpush1.bf16.msra.mxu0 0
    %378 = vmatprep.subr.bf16.mxu0 0
    %379 = vmatpush1.bf16.msra.mxu0 0
    %380 = vmatprep.subr.bf16.mxu0 0
    %381 = vmatpush1.bf16.msra.mxu0 %v363
    %382 = vmatprep.subr.bf16.mxu0 0
    %383 = vmatpush1.bf16.msra.mxu0 %v362
    %384 = vmatprep.subr.bf16.mxu0 0
    %385 = vmatpush1.bf16.msra.mxu0 %v361
    %386 = vmatprep.subr.bf16.mxu0 0
    %387 = vmatpush1.bf16.msra.mxu0 %v360
    %388 = vmatprep.subr.bf16.mxu0 0
    %389 = vmatpush2.bf16.msra.mxu0 0
    %390 = vmatprep.subr.bf16.mxu0 0
    %391 = vmatpush2.bf16.msra.mxu0 0
    %392 = vmatprep.subr.bf16.mxu0 0
    %393 = vmatpush2.bf16.msra.mxu0 0
    %394 = vmatprep.subr.bf16.mxu0 0
    %395 = vmatpush2.bf16.msra.mxu0 0
    %396 = vmatprep.subr.bf16.mxu0 0
    %397 = vmatpush2.bf16.msra.mxu0 0
    %398 = vmatprep.subr.bf16.mxu0 0
    %399 = vmatpush2.bf16.msra.mxu0 0
    %400 = vmatprep.subr.bf16.mxu0 0
    %401 = vmatpush2.bf16.msra.mxu0 0
    %402 = vmatprep.subr.bf16.mxu0 0
    %403 = vmatpush2.bf16.msra.mxu0 0
    %404 = vmatprep.mubr.bf16.mxu0 0
    %405 = vmatmul.mubr.bf16.gmra.mxu0 %v370
    %v406 = vpop.f32.mrf.mxu0
    %v407 = vadd.f32 %v261, %v406
    %v408 = vpop.f32.mrf.mxu0
    %v409 = vpop.f32.mrf.mxu0
    %v410 = vpop.f32.mrf.mxu0
    %411 = vdwg.mxu0
    %v412 = vtanh.pop %v407
    %v413 = vmul.f32 %v412, %v40
    %v414 = vadd.f32 %v413, %v41
    %v415 = vmul.f32 %v414, 0.0
    %417 = vrot.lane.b32.xlu0 %v414, 64
    %v418 = vpop.permute.xlu0 %417
    %v420 = vmul.f32 %v414, %v418
    %422 = vrot.lane.b32.xlu0 %v420, 32
    %v423 = vpop.permute.xlu0 %422
    %v425 = vadd.f32 %v415, %v423
    %v426 = vtanh.pop %v425
    %428 = vrot.lane.b32.xlu0 %v426, 64
    %v429 = vpop.permute.xlu0 %428
    %v431 = vmul.f32 %v414, %v429
    %v432 = vpack.c.bf16 %v337, %v337
    %434 = vrot.lane.b32.xlu0 %v432, 32
    %v435 = vpop.permute.xlu0 %434
    %v437 = vsel %vm171, %v435, 0
    %439 = vmatprep.subr.bf16.mxu0 0
    %440 = vmatpush1.bf16.msra.mxu0 0
    %441 = vmatprep.subr.bf16.mxu0 0
    %442 = vmatpush1.bf16.msra.mxu0 0
    %443 = vmatprep.subr.bf16.mxu0 0
    %444 = vmatpush1.bf16.msra.mxu0 0
    %445 = vmatprep.subr.bf16.mxu0 0
    %446 = vmatpush1.bf16.msra.mxu0 0
    %447 = vmatprep.subr.bf16.mxu0 0
    %448 = vmatpush1.bf16.msra.mxu0 0
    %449 = vmatprep.subr.bf16.mxu0 0
    %450 = vmatpush1.bf16.msra.mxu0 0
    %451 = vmatprep.subr.bf16.mxu0 0
    %452 = vmatpush1.bf16.msra.mxu0 %v271
    %453 = vmatprep.subr.bf16.mxu0 0
    %454 = vmatpush1.bf16.msra.mxu0 %v270
    %455 = vmatprep.subr.bf16.mxu0 0
    %456 = vmatpush2.bf16.msra.mxu0 0
    %457 = vmatprep.subr.bf16.mxu0 0
    %458 = vmatpush2.bf16.msra.mxu0 0
    %459 = vmatprep.subr.bf16.mxu0 0
    %460 = vmatpush2.bf16.msra.mxu0 0
    %461 = vmatprep.subr.bf16.mxu0 0
    %462 = vmatpush2.bf16.msra.mxu0 0
    %463 = vmatprep.subr.bf16.mxu0 0
    %464 = vmatpush2.bf16.msra.mxu0 0
    %465 = vmatprep.subr.bf16.mxu0 0
    %466 = vmatpush2.bf16.msra.mxu0 0
    %467 = vmatprep.subr.bf16.mxu0 0
    %468 = vmatpush2.bf16.msra.mxu0 0
    %469 = vmatprep.subr.bf16.mxu0 0
    %470 = vmatpush2.bf16.msra.mxu0 0
    %471 = vmatprep.mubr.bf16.mxu0 0
    %472 = vmatmul.mubr.bf16.gmra.mxu0 %v437
    %v473 = vpop.f32.mrf.mxu0
    %v474 = vadd.f32 0.0, %v473
    %v475 = vpop.f32.mrf.mxu0
    %v476 = vpop.f32.mrf.mxu0
    %v477 = vpop.f32.mrf.mxu0
    %478 = vdwg.mxu0
    %v479 = vadd.f32 %v222, %v474
    %v480 = vtanh.pop %v479
    %v481 = vmul.f32 %v480, %v40
    %v482 = vadd.f32 %v481, %v41
    %v483 = vmul.f32 %v482, %v331
    %485 = vrot.lane.b32.xlu0 %v482, 64
    %v486 = vpop.permute.xlu0 %485
    %v488 = vmul.f32 %v482, %v486
    %490 = vrot.lane.b32.xlu0 %v488, 32
    %v491 = vpop.permute.xlu0 %490
    %v493 = vadd.f32 %v483, %v491
    %v494 = vtanh.pop %v493
    %496 = vrot.lane.b32.xlu0 %v494, 64
    %v497 = vpop.permute.xlu0 %496
    %v499 = vmul.f32 %v482, %v497
    %501 = vrot.lane.b32.xlu0 %v499, 32
    %v502 = vpop.permute.xlu0 %501
    %505 = vrot.lane.b32.xlu0 %v431, 64
    %v506 = vpop.permute.xlu0 %505
    %v508 = vsel %vm171, %v502, %v506
    %v509 = vpack.c.bf16 %v508, %v508
    %v511 = vsel %vm368, %v509, 0
    %513 = vmatprep.subr.bf16.mxu0 0
    %514 = vmatpush1.bf16.msra.mxu0 0
    %515 = vmatprep.subr.bf16.mxu0 0
    %516 = vmatpush1.bf16.msra.mxu0 0
    %517 = vmatprep.subr.bf16.mxu0 0
    %518 = vmatpush1.bf16.msra.mxu0 0
    %519 = vmatprep.subr.bf16.mxu0 0
    %520 = vmatpush1.bf16.msra.mxu0 0
    %521 = vmatprep.subr.bf16.mxu0 0
    %522 = vmatpush1.bf16.msra.mxu0 %v363
    %523 = vmatprep.subr.bf16.mxu0 0
    %524 = vmatpush1.bf16.msra.mxu0 %v362
    %525 = vmatprep.subr.bf16.mxu0 0
    %526 = vmatpush1.bf16.msra.mxu0 %v361
    %527 = vmatprep.subr.bf16.mxu0 0
    %528 = vmatpush1.bf16.msra.mxu0 %v360
    %529 = vmatprep.subr.bf16.mxu0 0
    %530 = vmatpush2.bf16.msra.mxu0 0
    %531 = vmatprep.subr.bf16.mxu0 0
    %532 = vmatpush2.bf16.msra.mxu0 0
    %533 = vmatprep.subr.bf16.mxu0 0
    %534 = vmatpush2.bf16.msra.mxu0 0
    %535 = vmatprep.subr.bf16.mxu0 0
    %536 = vmatpush2.bf16.msra.mxu0 0
    %537 = vmatprep.subr.bf16.mxu0 0
    %538 = vmatpush2.bf16.msra.mxu0 0
    %539 = vmatprep.subr.bf16.mxu0 0
    %540 = vmatpush2.bf16.msra.mxu0 0
    %541 = vmatprep.subr.bf16.mxu0 0
    %542 = vmatpush2.bf16.msra.mxu0 0
    %543 = vmatprep.subr.bf16.mxu0 0
    %544 = vmatpush2.bf16.msra.mxu0 0
    %545 = vmatprep.mubr.bf16.mxu0 0
    %546 = vmatmul.mubr.bf16.gmra.mxu0 %v511
    %v547 = vpop.f32.mrf.mxu0
    %v548 = vadd.f32 %v261, %v547
    %v549 = vpop.f32.mrf.mxu0
    %v550 = vpop.f32.mrf.mxu0
    %v551 = vpop.f32.mrf.mxu0
    %552 = vdwg.mxu0
    %v553 = vtanh.pop %v548
    %v554 = vmul.f32 %v553, %v40
    %v555 = vadd.f32 %v554, %v41
    %v556 = vmul.f32 %v555, %v425
    %558 = vrot.lane.b32.xlu0 %v555, 64
    %v559 = vpop.permute.xlu0 %558
    %v561 = vmul.f32 %v555, %v559
    %563 = vrot.lane.b32.xlu0 %v561, 32
    %v564 = vpop.permute.xlu0 %563
    %v566 = vadd.f32 %v556, %v564
    %v567 = vtanh.pop %v566
    %569 = vrot.lane.b32.xlu0 %v567, 64
    %v570 = vpop.permute.xlu0 %569
    %v572 = vmul.f32 %v555, %v570
    %v573 = vpack.c.bf16 %v499, %v499
    %575 = vrot.lane.b32.xlu0 %v573, 32
    %v576 = vpop.permute.xlu0 %575
    %v578 = vsel %vm171, %v576, 0
    %580 = vmatprep.subr.bf16.mxu0 0
    %581 = vmatpush1.bf16.msra.mxu0 0
    %582 = vmatprep.subr.bf16.mxu0 0
    %583 = vmatpush1.bf16.msra.mxu0 0
    %584 = vmatprep.subr.bf16.mxu0 0
    %585 = vmatpush1.bf16.msra.mxu0 0
    %586 = vmatprep.subr.bf16.mxu0 0
    %587 = vmatpush1.bf16.msra.mxu0 0
    %588 = vmatprep.subr.bf16.mxu0 0
    %589 = vmatpush1.bf16.msra.mxu0 0
    %590 = vmatprep.subr.bf16.mxu0 0
    %591 = vmatpush1.bf16.msra.mxu0 0
    %592 = vmatprep.subr.bf16.mxu0 0
    %593 = vmatpush1.bf16.msra.mxu0 %v271
    %594 = vmatprep.subr.bf16.mxu0 0
    %595 = vmatpush1.bf16.msra.mxu0 %v270
    %596 = vmatprep.subr.bf16.mxu0 0
    %597 = vmatpush2.bf16.msra.mxu0 0
    %598 = vmatprep.subr.bf16.mxu0 0
    %599 = vmatpush2.bf16.msra.mxu0 0
    %600 = vmatprep.subr.bf16.mxu0 0
    %601 = vmatpush2.bf16.msra.mxu0 0
    %602 = vmatprep.subr.bf16.mxu0 0
    %603 = vmatpush2.bf16.msra.mxu0 0
    %604 = vmatprep.subr.bf16.mxu0 0
    %605 = vmatpush2.bf16.msra.mxu0 0
    %606 = vmatprep.subr.bf16.mxu0 0
    %607 = vmatpush2.bf16.msra.mxu0 0
    %608 = vmatprep.subr.bf16.mxu0 0
    %609 = vmatpush2.bf16.msra.mxu0 0
    %610 = vmatprep.subr.bf16.mxu0 0
    %611 = vmatpush2.bf16.msra.mxu0 0
    %612 = vmatprep.mubr.bf16.mxu0 0
    %613 = vmatmul.mubr.bf16.gmra.mxu0 %v578
    %v614 = vpop.f32.mrf.mxu0
    %v615 = vadd.f32 0.0, %v614
    %v616 = vpop.f32.mrf.mxu0
    %v617 = vpop.f32.mrf.mxu0
    %v618 = vpop.f32.mrf.mxu0
    %619 = vdwg.mxu0
    %v620 = vadd.f32 %v227, %v615
    %v621 = vtanh.pop %v620
    %v622 = vmul.f32 %v621, %v40
    %v623 = vadd.f32 %v622, %v41
    %v624 = vmul.f32 %v623, %v493
    %626 = vrot.lane.b32.xlu0 %v623, 64
    %v627 = vpop.permute.xlu0 %626
    %v629 = vmul.f32 %v623, %v627
    %631 = vrot.lane.b32.xlu0 %v629, 32
    %v632 = vpop.permute.xlu0 %631
    %v634 = vadd.f32 %v624, %v632
    %v635 = vtanh.pop %v634
    %637 = vrot.lane.b32.xlu0 %v635, 64
    %v638 = vpop.permute.xlu0 %637
    %v640 = vmul.f32 %v623, %v638
    %642 = vrot.lane.b32.xlu0 %v640, 32
    %v643 = vpop.permute.xlu0 %642
    %646 = vrot.lane.b32.xlu0 %v572, 64
    %v647 = vpop.permute.xlu0 %646
    %v649 = vsel %vm171, %v643, %v647
    %v650 = vpack.c.bf16 %v649, %v649
    %v652 = vsel %vm368, %v650, 0
    %654 = vmatprep.subr.bf16.mxu0 0
    %655 = vmatpush1.bf16.msra.mxu0 0
    %656 = vmatprep.subr.bf16.mxu0 0
    %657 = vmatpush1.bf16.msra.mxu0 0
    %658 = vmatprep.subr.bf16.mxu0 0
    %659 = vmatpush1.bf16.msra.mxu0 0
    %660 = vmatprep.subr.bf16.mxu0 0
    %661 = vmatpush1.bf16.msra.mxu0 0
    %662 = vmatprep.subr.bf16.mxu0 0
    %663 = vmatpush1.bf16.msra.mxu0 %v363
    %664 = vmatprep.subr.bf16.mxu0 0
    %665 = vmatpush1.bf16.msra.mxu0 %v362
    %666 = vmatprep.subr.bf16.mxu0 0
    %667 = vmatpush1.bf16.msra.mxu0 %v361
    %668 = vmatprep.subr.bf16.mxu0 0
    %669 = vmatpush1.bf16.msra.mxu0 %v360
    %670 = vmatprep.subr.bf16.mxu0 0
    %671 = vmatpush2.bf16.msra.mxu0 0
    %672 = vmatprep.subr.bf16.mxu0 0
    %673 = vmatpush2.bf16.msra.mxu0 0
    %674 = vmatprep.subr.bf16.mxu0 0
    %675 = vmatpush2.bf16.msra.mxu0 0
    %676 = vmatprep.subr.bf16.mxu0 0
    %677 = vmatpush2.bf16.msra.mxu0 0
    %678 = vmatprep.subr.bf16.mxu0 0
    %679 = vmatpush2.bf16.msra.mxu0 0
    %680 = vmatprep.subr.bf16.mxu0 0
    %681 = vmatpush2.bf16.msra.mxu0 0
    %682 = vmatprep.subr.bf16.mxu0 0
    %683 = vmatpush2.bf16.msra.mxu0 0
    %684 = vmatprep.subr.bf16.mxu0 0
    %685 = vmatpush2.bf16.msra.mxu0 0
    %686 = vmatprep.mubr.bf16.mxu0 0
    %687 = vmatmul.mubr.bf16.gmra.mxu0 %v652
    %v688 = vpop.f32.mrf.mxu0
    %v689 = vadd.f32 %v261, %v688
    %v690 = vpop.f32.mrf.mxu0
    %v691 = vpop.f32.mrf.mxu0
    %v692 = vpop.f32.mrf.mxu0
    %693 = vdwg.mxu0
    %v694 = vtanh.pop %v689
    %v695 = vmul.f32 %v694, %v40
    %v696 = vadd.f32 %v695, %v41
    %v697 = vmul.f32 %v696, %v566
    %699 = vrot.lane.b32.xlu0 %v696, 64
    %v700 = vpop.permute.xlu0 %699
    %v702 = vmul.f32 %v696, %v700
    %704 = vrot.lane.b32.xlu0 %v702, 32
    %v705 = vpop.permute.xlu0 %704
    %v707 = vadd.f32 %v697, %v705
    %v708 = vtanh.pop %v707
    %710 = vrot.lane.b32.xlu0 %v708, 64
    %v711 = vpop.permute.xlu0 %710
    %v713 = vmul.f32 %v696, %v711
    %v714 = vpack.c.bf16 %v640, %v640
    %716 = vrot.lane.b32.xlu0 %v714, 32
    %v717 = vpop.permute.xlu0 %716
    %v719 = vsel %vm171, %v717, 0
    %721 = vmatprep.subr.bf16.mxu0 0
    %722 = vmatpush1.bf16.msra.mxu0 0
    %723 = vmatprep.subr.bf16.mxu0 0
    %724 = vmatpush1.bf16.msra.mxu0 0
    %725 = vmatprep.subr.bf16.mxu0 0
    %726 = vmatpush1.bf16.msra.mxu0 0
    %727 = vmatprep.subr.bf16.mxu0 0
    %728 = vmatpush1.bf16.msra.mxu0 0
    %729 = vmatprep.subr.bf16.mxu0 0
    %730 = vmatpush1.bf16.msra.mxu0 0
    %731 = vmatprep.subr.bf16.mxu0 0
    %732 = vmatpush1.bf16.msra.mxu0 0
    %733 = vmatprep.subr.bf16.mxu0 0
    %734 = vmatpush1.bf16.msra.mxu0 %v271
    %735 = vmatprep.subr.bf16.mxu0 0
    %736 = vmatpush1.bf16.msra.mxu0 %v270
    %737 = vmatprep.subr.bf16.mxu0 0
    %738 = vmatpush2.bf16.msra.mxu0 0
    %739 = vmatprep.subr.bf16.mxu0 0
    %740 = vmatpush2.bf16.msra.mxu0 0
    %741 = vmatprep.subr.bf16.mxu0 0
    %742 = vmatpush2.bf16.msra.mxu0 0
    %743 = vmatprep.subr.bf16.mxu0 0
    %744 = vmatpush2.bf16.msra.mxu0 0
    %745 = vmatprep.subr.bf16.mxu0 0
    %746 = vmatpush2.bf16.msra.mxu0 0
    %747 = vmatprep.subr.bf16.mxu0 0
    %748 = vmatpush2.bf16.msra.mxu0 0
    %749 = vmatprep.subr.bf16.mxu0 0
    %750 = vmatpush2.bf16.msra.mxu0 0
    %751 = vmatprep.subr.bf16.mxu0 0
    %752 = vmatpush2.bf16.msra.mxu0 0
    %753 = vmatprep.mubr.bf16.mxu0 0
    %754 = vmatmul.mubr.bf16.gmra.mxu0 %v719
    %v755 = vpop.f32.mrf.mxu0
    %v756 = vadd.f32 0.0, %v755
    %v757 = vpop.f32.mrf.mxu0
    %v758 = vpop.f32.mrf.mxu0
    %v759 = vpop.f32.mrf.mxu0
    %760 = vdwg.mxu0
    %v761 = vadd.f32 %v230, %v756
    %v762 = vtanh.pop %v761
    %v763 = vmul.f32 %v762, %v40
    %v764 = vadd.f32 %v763, %v41
    %v765 = vmul.f32 %v764, %v634
    %767 = vrot.lane.b32.xlu0 %v764, 64
    %v768 = vpop.permute.xlu0 %767
    %v770 = vmul.f32 %v764, %v768
    %772 = vrot.lane.b32.xlu0 %v770, 32
    %v773 = vpop.permute.xlu0 %772
    %v775 = vadd.f32 %v765, %v773
    %v776 = vtanh.pop %v775
    %778 = vrot.lane.b32.xlu0 %v776, 64
    %v779 = vpop.permute.xlu0 %778
    %v781 = vmul.f32 %v764, %v779
    %783 = vrot.lane.b32.xlu0 %v781, 32
    %v784 = vpop.permute.xlu0 %783
    %787 = vrot.lane.b32.xlu0 %v713, 64
    %v788 = vpop.permute.xlu0 %787
    %v790 = vsel %vm171, %v784, %v788
    %v791 = vpack.c.bf16 %v790, %v790
    %v793 = vsel %vm368, %v791, 0
    %795 = vmatprep.subr.bf16.mxu0 0
    %796 = vmatpush1.bf16.msra.mxu0 0
    %797 = vmatprep.subr.bf16.mxu0 0
    %798 = vmatpush1.bf16.msra.mxu0 0
    %799 = vmatprep.subr.bf16.mxu0 0
    %800 = vmatpush1.bf16.msra.mxu0 0
    %801 = vmatprep.subr.bf16.mxu0 0
    %802 = vmatpush1.bf16.msra.mxu0 0
    %803 = vmatprep.subr.bf16.mxu0 0
    %804 = vmatpush1.bf16.msra.mxu0 %v363
    %805 = vmatprep.subr.bf16.mxu0 0
    %806 = vmatpush1.bf16.msra.mxu0 %v362
    %807 = vmatprep.subr.bf16.mxu0 0
    %808 = vmatpush1.bf16.msra.mxu0 %v361
    %809 = vmatprep.subr.bf16.mxu0 0
    %810 = vmatpush1.bf16.msra.mxu0 %v360
    %811 = vmatprep.subr.bf16.mxu0 0
    %812 = vmatpush2.bf16.msra.mxu0 0
    %813 = vmatprep.subr.bf16.mxu0 0
    %814 = vmatpush2.bf16.msra.mxu0 0
    %815 = vmatprep.subr.bf16.mxu0 0
    %816 = vmatpush2.bf16.msra.mxu0 0
    %817 = vmatprep.subr.bf16.mxu0 0
    %818 = vmatpush2.bf16.msra.mxu0 0
    %819 = vmatprep.subr.bf16.mxu0 0
    %820 = vmatpush2.bf16.msra.mxu0 0
    %821 = vmatprep.subr.bf16.mxu0 0
    %822 = vmatpush2.bf16.msra.mxu0 0
    %823 = vmatprep.subr.bf16.mxu0 0
    %824 = vmatpush2.bf16.msra.mxu0 0
    %825 = vmatprep.subr.bf16.mxu0 0
    %826 = vmatpush2.bf16.msra.mxu0 0
    %827 = vmatprep.mubr.bf16.mxu0 0
    %828 = vmatmul.mubr.bf16.gmra.mxu0 %v793
    %v829 = vpop.f32.mrf.mxu0
    %v830 = vadd.f32 %v261, %v829
    %v831 = vpop.f32.mrf.mxu0
    %v832 = vpop.f32.mrf.mxu0
    %v833 = vpop.f32.mrf.mxu0
    %834 = vdwg.mxu0
    %v835 = vtanh.pop %v830
    %v836 = vmul.f32 %v835, %v40
    %v837 = vadd.f32 %v836, %v41
    %v838 = vmul.f32 %v837, %v707
    %840 = vrot.lane.b32.xlu0 %v837, 64
    %v841 = vpop.permute.xlu0 %840
    %v843 = vmul.f32 %v837, %v841
    %845 = vrot.lane.b32.xlu0 %v843, 32
    %v846 = vpop.permute.xlu0 %845
    %v848 = vadd.f32 %v838, %v846
    %v849 = vtanh.pop %v848
    %851 = vrot.lane.b32.xlu0 %v849, 64
    %v852 = vpop.permute.xlu0 %851
    %v854 = vmul.f32 %v837, %v852
    %v855 = vpack.c.bf16 %v781, %v781
    %857 = vrot.lane.b32.xlu0 %v855, 32
    %v858 = vpop.permute.xlu0 %857
    %v860 = vsel %vm171, %v858, 0
    %862 = vmatprep.subr.bf16.mxu0 0
    %863 = vmatpush1.bf16.msra.mxu0 0
    %864 = vmatprep.subr.bf16.mxu0 0
    %865 = vmatpush1.bf16.msra.mxu0 0
    %866 = vmatprep.subr.bf16.mxu0 0
    %867 = vmatpush1.bf16.msra.mxu0 0
    %868 = vmatprep.subr.bf16.mxu0 0
    %869 = vmatpush1.bf16.msra.mxu0 0
    %870 = vmatprep.subr.bf16.mxu0 0
    %871 = vmatpush1.bf16.msra.mxu0 0
    %872 = vmatprep.subr.bf16.mxu0 0
    %873 = vmatpush1.bf16.msra.mxu0 0
    %874 = vmatprep.subr.bf16.mxu0 0
    %875 = vmatpush1.bf16.msra.mxu0 %v271
    %876 = vmatprep.subr.bf16.mxu0 0
    %877 = vmatpush1.bf16.msra.mxu0 %v270
    %878 = vmatprep.subr.bf16.mxu0 0
    %879 = vmatpush2.bf16.msra.mxu0 0
    %880 = vmatprep.subr.bf16.mxu0 0
    %881 = vmatpush2.bf16.msra.mxu0 0
    %882 = vmatprep.subr.bf16.mxu0 0
    %883 = vmatpush2.bf16.msra.mxu0 0
    %884 = vmatprep.subr.bf16.mxu0 0
    %885 = vmatpush2.bf16.msra.mxu0 0
    %886 = vmatprep.subr.bf16.mxu0 0
    %887 = vmatpush2.bf16.msra.mxu0 0
    %888 = vmatprep.subr.bf16.mxu0 0
    %889 = vmatpush2.bf16.msra.mxu0 0
    %890 = vmatprep.subr.bf16.mxu0 0
    %891 = vmatpush2.bf16.msra.mxu0 0
    %892 = vmatprep.subr.bf16.mxu0 0
    %893 = vmatpush2.bf16.msra.mxu0 0
    %894 = vmatprep.mubr.bf16.mxu0 0
    %895 = vmatmul.mubr.bf16.gmra.mxu0 %v860
    %v896 = vpop.f32.mrf.mxu0
    %v897 = vadd.f32 0.0, %v896
    %v898 = vpop.f32.mrf.mxu0
    %v899 = vpop.f32.mrf.mxu0
    %v900 = vpop.f32.mrf.mxu0
    %901 = vdwg.mxu0
    %v902 = vadd.f32 %v235, %v897
    %v903 = vtanh.pop %v902
    %v904 = vmul.f32 %v903, %v40
    %v905 = vadd.f32 %v904, %v41
    %v906 = vmul.f32 %v905, %v775
    %908 = vrot.lane.b32.xlu0 %v905, 64
    %v909 = vpop.permute.xlu0 %908
    %v911 = vmul.f32 %v905, %v909
    %913 = vrot.lane.b32.xlu0 %v911, 32
    %v914 = vpop.permute.xlu0 %913
    %v916 = vadd.f32 %v906, %v914
    %v917 = vtanh.pop %v916
    %919 = vrot.lane.b32.xlu0 %v917, 64
    %v920 = vpop.permute.xlu0 %919
    %v922 = vmul.f32 %v905, %v920
    %924 = vrot.lane.b32.xlu0 %v922, 32
    %v925 = vpop.permute.xlu0 %924
    %928 = vrot.lane.b32.xlu0 %v854, 64
    %v929 = vpop.permute.xlu0 %928
    %v931 = vsel %vm171, %v925, %v929
    %v932 = vpack.c.bf16 %v931, %v931
    %v934 = vsel %vm368, %v932, 0
    %936 = vmatprep.subr.bf16.mxu0 0
    %937 = vmatpush1.bf16.msra.mxu0 0
    %938 = vmatprep.subr.bf16.mxu0 0
    %939 = vmatpush1.bf16.msra.mxu0 0
    %940 = vmatprep.subr.bf16.mxu0 0
    %941 = vmatpush1.bf16.msra.mxu0 0
    %942 = vmatprep.subr.bf16.mxu0 0
    %943 = vmatpush1.bf16.msra.mxu0 0
    %944 = vmatprep.subr.bf16.mxu0 0
    %945 = vmatpush1.bf16.msra.mxu0 %v363
    %946 = vmatprep.subr.bf16.mxu0 0
    %947 = vmatpush1.bf16.msra.mxu0 %v362
    %948 = vmatprep.subr.bf16.mxu0 0
    %949 = vmatpush1.bf16.msra.mxu0 %v361
    %950 = vmatprep.subr.bf16.mxu0 0
    %951 = vmatpush1.bf16.msra.mxu0 %v360
    %952 = vmatprep.subr.bf16.mxu0 0
    %953 = vmatpush2.bf16.msra.mxu0 0
    %954 = vmatprep.subr.bf16.mxu0 0
    %955 = vmatpush2.bf16.msra.mxu0 0
    %956 = vmatprep.subr.bf16.mxu0 0
    %957 = vmatpush2.bf16.msra.mxu0 0
    %958 = vmatprep.subr.bf16.mxu0 0
    %959 = vmatpush2.bf16.msra.mxu0 0
    %960 = vmatprep.subr.bf16.mxu0 0
    %961 = vmatpush2.bf16.msra.mxu0 0
    %962 = vmatprep.subr.bf16.mxu0 0
    %963 = vmatpush2.bf16.msra.mxu0 0
    %964 = vmatprep.subr.bf16.mxu0 0
    %965 = vmatpush2.bf16.msra.mxu0 0
    %966 = vmatprep.subr.bf16.mxu0 0
    %967 = vmatpush2.bf16.msra.mxu0 0
    %968 = vmatprep.mubr.bf16.mxu0 0
    %969 = vmatmul.mubr.bf16.gmra.mxu0 %v934
    %v970 = vpop.f32.mrf.mxu0
    %v971 = vadd.f32 %v261, %v970
    %v972 = vpop.f32.mrf.mxu0
    %v973 = vpop.f32.mrf.mxu0
    %v974 = vpop.f32.mrf.mxu0
    %975 = vdwg.mxu0
    %v976 = vtanh.pop %v971
    %v977 = vmul.f32 %v976, %v40
    %v978 = vadd.f32 %v977, %v41
    %v979 = vmul.f32 %v978, %v848
    %981 = vrot.lane.b32.xlu0 %v978, 64
    %v982 = vpop.permute.xlu0 %981
    %v984 = vmul.f32 %v978, %v982
    %986 = vrot.lane.b32.xlu0 %v984, 32
    %v987 = vpop.permute.xlu0 %986
    %v989 = vadd.f32 %v979, %v987
    %v990 = vtanh.pop %v989
    %992 = vrot.lane.b32.xlu0 %v990, 64
    %v993 = vpop.permute.xlu0 %992
    %v995 = vmul.f32 %v978, %v993
    %v996 = vpack.c.bf16 %v922, %v922
    %998 = vrot.lane.b32.xlu0 %v996, 32
    %v999 = vpop.permute.xlu0 %998
    %v1001 = vsel %vm171, %v999, 0
    %1003 = vmatprep.subr.bf16.mxu0 0
    %1004 = vmatpush1.bf16.msra.mxu0 0
    %1005 = vmatprep.subr.bf16.mxu0 0
    %1006 = vmatpush1.bf16.msra.mxu0 0
    %1007 = vmatprep.subr.bf16.mxu0 0
    %1008 = vmatpush1.bf16.msra.mxu0 0
    %1009 = vmatprep.subr.bf16.mxu0 0
    %1010 = vmatpush1.bf16.msra.mxu0 0
    %1011 = vmatprep.subr.bf16.mxu0 0
    %1012 = vmatpush1.bf16.msra.mxu0 0
    %1013 = vmatprep.subr.bf16.mxu0 0
    %1014 = vmatpush1.bf16.msra.mxu0 0
    %1015 = vmatprep.subr.bf16.mxu0 0
    %1016 = vmatpush1.bf16.msra.mxu0 %v271
    %1017 = vmatprep.subr.bf16.mxu0 0
    %1018 = vmatpush1.bf16.msra.mxu0 %v270
    %1019 = vmatprep.subr.bf16.mxu0 0
    %1020 = vmatpush2.bf16.msra.mxu0 0
    %1021 = vmatprep.subr.bf16.mxu0 0
    %1022 = vmatpush2.bf16.msra.mxu0 0
    %1023 = vmatprep.subr.bf16.mxu0 0
    %1024 = vmatpush2.bf16.msra.mxu0 0
    %1025 = vmatprep.subr.bf16.mxu0 0
    %1026 = vmatpush2.bf16.msra.mxu0 0
    %1027 = vmatprep.subr.bf16.mxu0 0
    %1028 = vmatpush2.bf16.msra.mxu0 0
    %1029 = vmatprep.subr.bf16.mxu0 0
    %1030 = vmatpush2.bf16.msra.mxu0 0
    %1031 = vmatprep.subr.bf16.mxu0 0
    %1032 = vmatpush2.bf16.msra.mxu0 0
    %1033 = vmatprep.subr.bf16.mxu0 0
    %1034 = vmatpush2.bf16.msra.mxu0 0
    %1035 = vmatprep.mubr.bf16.mxu0 0
    %1036 = vmatmul.mubr.bf16.gmra.mxu0 %v1001
    %v1037 = vpop.f32.mrf.mxu0
    %v1038 = vadd.f32 0.0, %v1037
    %v1039 = vpop.f32.mrf.mxu0
    %v1040 = vpop.f32.mrf.mxu0
    %v1041 = vpop.f32.mrf.mxu0
    %1042 = vdwg.mxu0
    %v1043 = vadd.f32 %v238, %v1038
    %v1044 = vtanh.pop %v1043
    %v1045 = vmul.f32 %v1044, %v40
    %v1046 = vadd.f32 %v1045, %v41
    %v1047 = vmul.f32 %v1046, %v916
    %1049 = vrot.lane.b32.xlu0 %v1046, 64
    %v1050 = vpop.permute.xlu0 %1049
    %v1052 = vmul.f32 %v1046, %v1050
    %1054 = vrot.lane.b32.xlu0 %v1052, 32
    %v1055 = vpop.permute.xlu0 %1054
    %v1057 = vadd.f32 %v1047, %v1055
    %v1058 = vtanh.pop %v1057
    %1060 = vrot.lane.b32.xlu0 %v1058, 64
    %v1061 = vpop.permute.xlu0 %1060
    %v1063 = vmul.f32 %v1046, %v1061
    %1065 = vrot.lane.b32.xlu0 %v1063, 32
    %v1066 = vpop.permute.xlu0 %1065
    %1069 = vrot.lane.b32.xlu0 %v995, 64
    %v1070 = vpop.permute.xlu0 %1069
    %v1072 = vsel %vm171, %v1066, %v1070
    %v1073 = vpack.c.bf16 %v1072, %v1072
    %v1075 = vsel %vm368, %v1073, 0
    %1077 = vmatprep.subr.bf16.mxu0 0
    %1078 = vmatpush1.bf16.msra.mxu0 0
    %1079 = vmatprep.subr.bf16.mxu0 0
    %1080 = vmatpush1.bf16.msra.mxu0 0
    %1081 = vmatprep.subr.bf16.mxu0 0
    %1082 = vmatpush1.bf16.msra.mxu0 0
    %1083 = vmatprep.subr.bf16.mxu0 0
    %1084 = vmatpush1.bf16.msra.mxu0 0
    %1085 = vmatprep.subr.bf16.mxu0 0
    %1086 = vmatpush1.bf16.msra.mxu0 %v363
    %1087 = vmatprep.subr.bf16.mxu0 0
    %1088 = vmatpush1.bf16.msra.mxu0 %v362
    %1089 = vmatprep.subr.bf16.mxu0 0
    %1090 = vmatpush1.bf16.msra.mxu0 %v361
    %1091 = vmatprep.subr.bf16.mxu0 0
    %1092 = vmatpush1.bf16.msra.mxu0 %v360
    %1093 = vmatprep.subr.bf16.mxu0 0
    %1094 = vmatpush2.bf16.msra.mxu0 0
    %1095 = vmatprep.subr.bf16.mxu0 0
    %1096 = vmatpush2.bf16.msra.mxu0 0
    %1097 = vmatprep.subr.bf16.mxu0 0
    %1098 = vmatpush2.bf16.msra.mxu0 0
    %1099 = vmatprep.subr.bf16.mxu0 0
    %1100 = vmatpush2.bf16.msra.mxu0 0
    %1101 = vmatprep.subr.bf16.mxu0 0
    %1102 = vmatpush2.bf16.msra.mxu0 0
    %1103 = vmatprep.subr.bf16.mxu0 0
    %1104 = vmatpush2.bf16.msra.mxu0 0
    %1105 = vmatprep.subr.bf16.mxu0 0
    %1106 = vmatpush2.bf16.msra.mxu0 0
    %1107 = vmatprep.subr.bf16.mxu0 0
    %1108 = vmatpush2.bf16.msra.mxu0 0
    %1109 = vmatprep.mubr.bf16.mxu0 0
    %1110 = vmatmul.mubr.bf16.gmra.mxu0 %v1075
    %v1111 = vpop.f32.mrf.mxu0
    %v1112 = vadd.f32 %v261, %v1111
    %v1113 = vpop.f32.mrf.mxu0
    %v1114 = vpop.f32.mrf.mxu0
    %v1115 = vpop.f32.mrf.mxu0
    %1116 = vdwg.mxu0
    %v1117 = vtanh.pop %v1112
    %v1118 = vmul.f32 %v1117, %v40
    %v1119 = vadd.f32 %v1118, %v41
    %v1120 = vmul.f32 %v1119, %v989
    %1122 = vrot.lane.b32.xlu0 %v1119, 64
    %v1123 = vpop.permute.xlu0 %1122
    %v1125 = vmul.f32 %v1119, %v1123
    %1127 = vrot.lane.b32.xlu0 %v1125, 32
    %v1128 = vpop.permute.xlu0 %1127
    %v1130 = vadd.f32 %v1120, %v1128
    %v1131 = vtanh.pop %v1130
    %1133 = vrot.lane.b32.xlu0 %v1131, 64
    %v1134 = vpop.permute.xlu0 %1133
    %v1136 = vmul.f32 %v1119, %v1134
    %v1137 = vpack.c.bf16 %v1063, %v1063
    %1139 = vrot.lane.b32.xlu0 %v1137, 32
    %v1140 = vpop.permute.xlu0 %1139
    %v1142 = vsel %vm171, %v1140, 0
    %1144 = vmatprep.subr.bf16.mxu0 0
    %1145 = vmatpush1.bf16.msra.mxu0 0
    %1146 = vmatprep.subr.bf16.mxu0 0
    %1147 = vmatpush1.bf16.msra.mxu0 0
    %1148 = vmatprep.subr.bf16.mxu0 0
    %1149 = vmatpush1.bf16.msra.mxu0 0
    %1150 = vmatprep.subr.bf16.mxu0 0
    %1151 = vmatpush1.bf16.msra.mxu0 0
    %1152 = vmatprep.subr.bf16.mxu0 0
    %1153 = vmatpush1.bf16.msra.mxu0 0
    %1154 = vmatprep.subr.bf16.mxu0 0
    %1155 = vmatpush1.bf16.msra.mxu0 0
    %1156 = vmatprep.subr.bf16.mxu0 0
    %1157 = vmatpush1.bf16.msra.mxu0 %v271
    %1158 = vmatprep.subr.bf16.mxu0 0
    %1159 = vmatpush1.bf16.msra.mxu0 %v270
    %1160 = vmatprep.subr.bf16.mxu0 0
    %1161 = vmatpush2.bf16.msra.mxu0 0
    %1162 = vmatprep.subr.bf16.mxu0 0
    %1163 = vmatpush2.bf16.msra.mxu0 0
    %1164 = vmatprep.subr.bf16.mxu0 0
    %1165 = vmatpush2.bf16.msra.mxu0 0
    %1166 = vmatprep.subr.bf16.mxu0 0
    %1167 = vmatpush2.bf16.msra.mxu0 0
    %1168 = vmatprep.subr.bf16.mxu0 0
    %1169 = vmatpush2.bf16.msra.mxu0 0
    %1170 = vmatprep.subr.bf16.mxu0 0
    %1171 = vmatpush2.bf16.msra.mxu0 0
    %1172 = vmatprep.subr.bf16.mxu0 0
    %1173 = vmatpush2.bf16.msra.mxu0 0
    %1174 = vmatprep.subr.bf16.mxu0 0
    %1175 = vmatpush2.bf16.msra.mxu0 0
    %1176 = vmatprep.mubr.bf16.mxu0 0
    %1177 = vmatmul.mubr.bf16.gmra.mxu0 %v1142
    %v1178 = vpop.f32.mrf.mxu0
    %v1179 = vadd.f32 0.0, %v1178
    %v1180 = vpop.f32.mrf.mxu0
    %v1181 = vpop.f32.mrf.mxu0
    %v1182 = vpop.f32.mrf.mxu0
    %1183 = vdwg.mxu0
    %v1184 = vadd.f32 %v243, %v1179
    %v1185 = vtanh.pop %v1184
    %v1186 = vmul.f32 %v1185, %v40
    %v1187 = vadd.f32 %v1186, %v41
    %v1188 = vmul.f32 %v1187, %v1057
    %1190 = vrot.lane.b32.xlu0 %v1187, 64
    %v1191 = vpop.permute.xlu0 %1190
    %v1193 = vmul.f32 %v1187, %v1191
    %1195 = vrot.lane.b32.xlu0 %v1193, 32
    %v1196 = vpop.permute.xlu0 %1195
    %v1198 = vadd.f32 %v1188, %v1196
    %v1199 = vtanh.pop %v1198
    %1201 = vrot.lane.b32.xlu0 %v1199, 64
    %v1202 = vpop.permute.xlu0 %1201
    %v1204 = vmul.f32 %v1187, %v1202
    %1206 = vrot.lane.b32.xlu0 %v1204, 32
    %v1207 = vpop.permute.xlu0 %1206
    %1210 = vrot.lane.b32.xlu0 %v1136, 64
    %v1211 = vpop.permute.xlu0 %1210
    %v1213 = vsel %vm171, %v1207, %v1211
    %v1214 = vpack.c.bf16 %v1213, %v1213
    %v1216 = vsel %vm368, %v1214, 0
    %1218 = vmatprep.subr.bf16.mxu0 0
    %1219 = vmatpush1.bf16.msra.mxu0 0
    %1220 = vmatprep.subr.bf16.mxu0 0
    %1221 = vmatpush1.bf16.msra.mxu0 0
    %1222 = vmatprep.subr.bf16.mxu0 0
    %1223 = vmatpush1.bf16.msra.mxu0 0
    %1224 = vmatprep.subr.bf16.mxu0 0
    %1225 = vmatpush1.bf16.msra.mxu0 0
    %1226 = vmatprep.subr.bf16.mxu0 0
    %1227 = vmatpush1.bf16.msra.mxu0 %v363
    %1228 = vmatprep.subr.bf16.mxu0 0
    %1229 = vmatpush1.bf16.msra.mxu0 %v362
    %1230 = vmatprep.subr.bf16.mxu0 0
    %1231 = vmatpush1.bf16.msra.mxu0 %v361
    %1232 = vmatprep.subr.bf16.mxu0 0
    %1233 = vmatpush1.bf16.msra.mxu0 %v360
    %1234 = vmatprep.subr.bf16.mxu0 0
    %1235 = vmatpush2.bf16.msra.mxu0 0
    %1236 = vmatprep.subr.bf16.mxu0 0
    %1237 = vmatpush2.bf16.msra.mxu0 0
    %1238 = vmatprep.subr.bf16.mxu0 0
    %1239 = vmatpush2.bf16.msra.mxu0 0
    %1240 = vmatprep.subr.bf16.mxu0 0
    %1241 = vmatpush2.bf16.msra.mxu0 0
    %1242 = vmatprep.subr.bf16.mxu0 0
    %1243 = vmatpush2.bf16.msra.mxu0 0
    %1244 = vmatprep.subr.bf16.mxu0 0
    %1245 = vmatpush2.bf16.msra.mxu0 0
    %1246 = vmatprep.subr.bf16.mxu0 0
    %1247 = vmatpush2.bf16.msra.mxu0 0
    %1248 = vmatprep.subr.bf16.mxu0 0
    %1249 = vmatpush2.bf16.msra.mxu0 0
    %1250 = vmatprep.mubr.bf16.mxu0 0
    %1251 = vmatmul.mubr.bf16.gmra.mxu0 %v1216
    %v1252 = vpop.f32.mrf.mxu0
    %v1253 = vadd.f32 %v261, %v1252
    %v1254 = vpop.f32.mrf.mxu0
    %v1255 = vpop.f32.mrf.mxu0
    %v1256 = vpop.f32.mrf.mxu0
    %1257 = vdwg.mxu0
    %v1258 = vtanh.pop %v1253
    %v1259 = vmul.f32 %v1258, %v40
    %v1260 = vadd.f32 %v1259, %v41
    %v1261 = vmul.f32 %v1260, %v1130
    %1263 = vrot.lane.b32.xlu0 %v1260, 64
    %v1264 = vpop.permute.xlu0 %1263
    %v1266 = vmul.f32 %v1260, %v1264
    %1268 = vrot.lane.b32.xlu0 %v1266, 32
    %v1269 = vpop.permute.xlu0 %1268
    %v1271 = vadd.f32 %v1261, %v1269
    %v1272 = vtanh.pop %v1271
    %1274 = vrot.lane.b32.xlu0 %v1272, 64
    %v1275 = vpop.permute.xlu0 %1274
    %v1277 = vmul.f32 %v1260, %v1275
    %v1278 = vpack.c.bf16 %v1204, %v1204
    %1280 = vrot.lane.b32.xlu0 %v1278, 32
    %v1281 = vpop.permute.xlu0 %1280
    %v1283 = vsel %vm171, %v1281, 0
    %1285 = vmatprep.subr.bf16.mxu0 0
    %1286 = vmatpush1.bf16.msra.mxu0 0
    %1287 = vmatprep.subr.bf16.mxu0 0
    %1288 = vmatpush1.bf16.msra.mxu0 0
    %1289 = vmatprep.subr.bf16.mxu0 0
    %1290 = vmatpush1.bf16.msra.mxu0 0
    %1291 = vmatprep.subr.bf16.mxu0 0
    %1292 = vmatpush1.bf16.msra.mxu0 0
    %1293 = vmatprep.subr.bf16.mxu0 0
    %1294 = vmatpush1.bf16.msra.mxu0 0
    %1295 = vmatprep.subr.bf16.mxu0 0
    %1296 = vmatpush1.bf16.msra.mxu0 0
    %1297 = vmatprep.subr.bf16.mxu0 0
    %1298 = vmatpush1.bf16.msra.mxu0 %v271
    %1299 = vmatprep.subr.bf16.mxu0 0
    %1300 = vmatpush1.bf16.msra.mxu0 %v270
    %1301 = vmatprep.subr.bf16.mxu0 0
    %1302 = vmatpush2.bf16.msra.mxu0 0
    %1303 = vmatprep.subr.bf16.mxu0 0
    %1304 = vmatpush2.bf16.msra.mxu0 0
    %1305 = vmatprep.subr.bf16.mxu0 0
    %1306 = vmatpush2.bf16.msra.mxu0 0
    %1307 = vmatprep.subr.bf16.mxu0 0
    %1308 = vmatpush2.bf16.msra.mxu0 0
    %1309 = vmatprep.subr.bf16.mxu0 0
    %1310 = vmatpush2.bf16.msra.mxu0 0
    %1311 = vmatprep.subr.bf16.mxu0 0
    %1312 = vmatpush2.bf16.msra.mxu0 0
    %1313 = vmatprep.subr.bf16.mxu0 0
    %1314 = vmatpush2.bf16.msra.mxu0 0
    %1315 = vmatprep.subr.bf16.mxu0 0
    %1316 = vmatpush2.bf16.msra.mxu0 0
    %1317 = vmatprep.mubr.bf16.mxu0 0
    %1318 = vmatmul.mubr.bf16.gmra.mxu0 %v1283
    %v1319 = vpop.f32.mrf.mxu0
    %v1320 = vadd.f32 0.0, %v1319
    %v1321 = vpop.f32.mrf.mxu0
    %v1322 = vpop.f32.mrf.mxu0
    %v1323 = vpop.f32.mrf.mxu0
    %1324 = vdwg.mxu0
    %v1325 = vadd.f32 %v246, %v1320
    %v1326 = vtanh.pop %v1325
    %v1327 = vmul.f32 %v1326, %v40
    %v1328 = vadd.f32 %v1327, %v41
    %v1329 = vmul.f32 %v1328, %v1198
    %1331 = vrot.lane.b32.xlu0 %v1328, 64
    %v1332 = vpop.permute.xlu0 %1331
    %v1334 = vmul.f32 %v1328, %v1332
    %1336 = vrot.lane.b32.xlu0 %v1334, 32
    %v1337 = vpop.permute.xlu0 %1336
    %v1339 = vadd.f32 %v1329, %v1337
    %v1340 = vtanh.pop %v1339
    %1342 = vrot.lane.b32.xlu0 %v1340, 64
    %v1343 = vpop.permute.xlu0 %1342
    %v1345 = vmul.f32 %v1328, %v1343
    %1347 = vrot.lane.b32.xlu0 %v1345, 32
    %v1348 = vpop.permute.xlu0 %1347
    %1351 = vrot.lane.b32.xlu0 %v1277, 64
    %v1352 = vpop.permute.xlu0 %1351
    %v1354 = vsel %vm171, %v1348, %v1352
    %v1355 = vpack.c.bf16 %v1354, %v1354
    %v1357 = vsel %vm368, %v1355, 0
    %1359 = vmatprep.subr.bf16.mxu0 0
    %1360 = vmatpush1.bf16.msra.mxu0 0
    %1361 = vmatprep.subr.bf16.mxu0 0
    %1362 = vmatpush1.bf16.msra.mxu0 0
    %1363 = vmatprep.subr.bf16.mxu0 0
    %1364 = vmatpush1.bf16.msra.mxu0 0
    %1365 = vmatprep.subr.bf16.mxu0 0
    %1366 = vmatpush1.bf16.msra.mxu0 0
    %1367 = vmatprep.subr.bf16.mxu0 0
    %1368 = vmatpush1.bf16.msra.mxu0 %v363
    %1369 = vmatprep.subr.bf16.mxu0 0
    %1370 = vmatpush1.bf16.msra.mxu0 %v362
    %1371 = vmatprep.subr.bf16.mxu0 0
    %1372 = vmatpush1.bf16.msra.mxu0 %v361
    %1373 = vmatprep.subr.bf16.mxu0 0
    %1374 = vmatpush1.bf16.msra.mxu0 %v360
    %1375 = vmatprep.subr.bf16.mxu0 0
    %1376 = vmatpush2.bf16.msra.mxu0 0
    %1377 = vmatprep.subr.bf16.mxu0 0
    %1378 = vmatpush2.bf16.msra.mxu0 0
    %1379 = vmatprep.subr.bf16.mxu0 0
    %1380 = vmatpush2.bf16.msra.mxu0 0
    %1381 = vmatprep.subr.bf16.mxu0 0
    %1382 = vmatpush2.bf16.msra.mxu0 0
    %1383 = vmatprep.subr.bf16.mxu0 0
    %1384 = vmatpush2.bf16.msra.mxu0 0
    %1385 = vmatprep.subr.bf16.mxu0 0
    %1386 = vmatpush2.bf16.msra.mxu0 0
    %1387 = vmatprep.subr.bf16.mxu0 0
    %1388 = vmatpush2.bf16.msra.mxu0 0
    %1389 = vmatprep.subr.bf16.mxu0 0
    %1390 = vmatpush2.bf16.msra.mxu0 0
    %1391 = vmatprep.mubr.bf16.mxu0 0
    %1392 = vmatmul.mubr.bf16.gmra.mxu0 %v1357
    %v1393 = vpop.f32.mrf.mxu0
    %v1394 = vadd.f32 %v261, %v1393
    %v1395 = vpop.f32.mrf.mxu0
    %v1396 = vpop.f32.mrf.mxu0
    %v1397 = vpop.f32.mrf.mxu0
    %1398 = vdwg.mxu0
    %v1399 = vtanh.pop %v1394
    %v1400 = vmul.f32 %v1399, %v40
    %v1401 = vadd.f32 %v1400, %v41
    %v1402 = vmul.f32 %v1401, %v1271
    %1404 = vrot.lane.b32.xlu0 %v1401, 64
    %v1405 = vpop.permute.xlu0 %1404
    %v1407 = vmul.f32 %v1401, %v1405
    %1409 = vrot.lane.b32.xlu0 %v1407, 32
    %v1410 = vpop.permute.xlu0 %1409
    %v1412 = vadd.f32 %v1402, %v1410
    %v1413 = vtanh.pop %v1412
    %1415 = vrot.lane.b32.xlu0 %v1413, 64
    %v1416 = vpop.permute.xlu0 %1415
    %v1418 = vmul.f32 %v1401, %v1416
    %v1419 = vld [vmem:[%s1] sm:$0xff]
    %1420 = vset.pattern.permute.xlu0 0
    %1421 = vperm.xlu0 %1420, %v1419
    %v1422 = vpop.permute.xlu0 %1421
    %vm1423 = vcmp.eq.s32.totalorder %v36, %v1422
    %v1424 = vsel %vm1423, 1, 0
    %v1425 = vcvt.s32.f32 %v1424
    %v1426 = vpack.c.bf16 %v1425, %v1425
    %v1427 = vld [vmem:[%s2] sm:$0xff]
    %v1428 = vpack.c.bf16 %v1427, %v1427
    %v1429 = vld [vmem:[#allocation2 + $0x48] sm:$0xf]
    %v1430 = vld [vmem:[#allocation2 + $0x50] sm:$0x3]
    %vm1431 = vcmask 31744
    %v1433 = vsel %vm1431, %v1426, 0
    %vm1435 = vcmask 1041408
    %v1437 = vsel %vm1435, %v1430, 0
    %1439 = vmatprep.subr.bf16.mxu0 0
    %1440 = vmatpush1.bf16.msra.mxu0 0
    %1441 = vmatprep.subr.bf16.mxu0 0
    %1442 = vmatpush1.bf16.msra.mxu0 0
    %1443 = vmatprep.subr.bf16.mxu0 0
    %1444 = vmatpush1.bf16.msra.mxu0 0
    %1445 = vmatprep.subr.bf16.mxu0 0
    %1446 = vmatpush1.bf16.msra.mxu0 0
    %1447 = vmatprep.subr.bf16.mxu0 0
    %1448 = vmatpush1.bf16.msra.mxu0 0
    %1449 = vmatprep.subr.bf16.mxu0 0
    %1450 = vmatpush1.bf16.msra.mxu0 0
    %1451 = vmatprep.subr.bf16.mxu0 0
    %1452 = vmatpush1.bf16.msra.mxu0 0
    %1453 = vmatprep.subr.bf16.mxu0 0
    %1454 = vmatpush1.bf16.msra.mxu0 %v1437
    %1455 = vmatprep.subr.bf16.mxu0 0
    %1456 = vmatpush2.bf16.msra.mxu0 0
    %1457 = vmatprep.subr.bf16.mxu0 0
    %1458 = vmatpush2.bf16.msra.mxu0 0
    %1459 = vmatprep.subr.bf16.mxu0 0
    %1460 = vmatpush2.bf16.msra.mxu0 0
    %1461 = vmatprep.subr.bf16.mxu0 0
    %1462 = vmatpush2.bf16.msra.mxu0 0
    %1463 = vmatprep.subr.bf16.mxu0 0
    %1464 = vmatpush2.bf16.msra.mxu0 0
    %1465 = vmatprep.subr.bf16.mxu0 0
    %1466 = vmatpush2.bf16.msra.mxu0 0
    %1467 = vmatprep.subr.bf16.mxu0 0
    %1468 = vmatpush2.bf16.msra.mxu0 0
    %1469 = vmatprep.subr.bf16.mxu0 0
    %1470 = vmatpush2.bf16.msra.mxu0 0
    %1471 = vmatprep.mubr.bf16.mxu0 0
    %1472 = vmatmul.mubr.bf16.gmra.mxu0 %v1433
    %v1473 = vpop.f32.mrf.mxu0
    %v1474 = vadd.f32 0.0, %v1473
    %v1475 = vpop.f32.mrf.mxu0
    %v1476 = vpop.f32.mrf.mxu0
    %v1477 = vpop.f32.mrf.mxu0
    %1478 = vdwg.mxu0
    %v1480 = vsel %vm68, %v1428, 0
    %v1483 = vsel %vm81, %v1429, 0
    %1485 = vmatprep.subr.bf16.mxu0 0
    %1486 = vmatpush1.bf16.msra.mxu0 0
    %1487 = vmatprep.subr.bf16.mxu0 0
    %1488 = vmatpush1.bf16.msra.mxu0 0
    %1489 = vmatprep.subr.bf16.mxu0 0
    %1490 = vmatpush1.bf16.msra.mxu0 0
    %1491 = vmatprep.subr.bf16.mxu0 0
    %1492 = vmatpush1.bf16.msra.mxu0 0
    %1493 = vmatprep.subr.bf16.mxu0 0
    %1494 = vmatpush1.bf16.msra.mxu0 0
    %1495 = vmatprep.subr.bf16.mxu0 0
    %1496 = vmatpush1.bf16.msra.mxu0 0
    %1497 = vmatprep.subr.bf16.mxu0 0
    %1498 = vmatpush1.bf16.msra.mxu0 0
    %1499 = vmatprep.subr.bf16.mxu0 0
    %1500 = vmatpush1.bf16.msra.mxu0 %v1483
    %1501 = vmatprep.subr.bf16.mxu0 0
    %1502 = vmatpush2.bf16.msra.mxu0 0
    %1503 = vmatprep.subr.bf16.mxu0 0
    %1504 = vmatpush2.bf16.msra.mxu0 0
    %1505 = vmatprep.subr.bf16.mxu0 0
    %1506 = vmatpush2.bf16.msra.mxu0 0
    %1507 = vmatprep.subr.bf16.mxu0 0
    %1508 = vmatpush2.bf16.msra.mxu0 0
    %1509 = vmatprep.subr.bf16.mxu0 0
    %1510 = vmatpush2.bf16.msra.mxu0 0
    %1511 = vmatprep.subr.bf16.mxu0 0
    %1512 = vmatpush2.bf16.msra.mxu0 0
    %1513 = vmatprep.subr.bf16.mxu0 0
    %1514 = vmatpush2.bf16.msra.mxu0 0
    %1515 = vmatprep.subr.bf16.mxu0 0
    %1516 = vmatpush2.bf16.msra.mxu0 0
    %1517 = vmatprep.mubr.bf16.mxu0 0
    %1518 = vmatmul.mubr.bf16.gmra.mxu0 %v1480
    %v1519 = vpop.f32.mrf.mxu0
    %v1520 = vadd.f32 %v1474, %v1519
    %v1521 = vpop.f32.mrf.mxu0
    %v1522 = vpop.f32.mrf.mxu0
    %v1523 = vpop.f32.mrf.mxu0
    %1524 = vdwg.mxu0
    %v1525 = vld [vmem:[%s4 + $0x3] sm:$0x1]
    %v1526 = vlaneseq
    %v1527 = vshrl.u32 %v1526, 7
    %v1528 = vsub.s32 0, %v1527
    %v1529 = vrot.slane %v1525, %v1528
    %v1530 = vadd.f32 %v1520, %v1529
    %1531 = vrot.lane.b32.xlu0 %v1345, 64
    %v1532 = vpop.permute.xlu0 %1531
    %v1534 = vsel %vm171, %v1530, %v1532
    %v1535 = vpack.c.bf16 %v1534, %v1534
    %v1536 = vld [vmem:[#allocation2 + $0x58] sm:$0xf]
    %v1537 = vld [vmem:[#allocation2 + $0x5c] sm:$0xf]
    %v1538 = vld [vmem:[#allocation2 + $0x60] sm:$0xf]
    %v1539 = vld [vmem:[#allocation2 + $0x64] sm:$0xf]
    %v1540 = vld [vmem:[#allocation2 + $0x68] sm:$0xf]
    %v1541 = vld [vmem:[#allocation2 + $0x6c] sm:$0xf]
    %v1542 = vld [vmem:[#allocation2 + $0x70] sm:$0xf]
    %v1543 = vld [vmem:[#allocation2 + $0x74] sm:$0xf]
    %v1544 = vld [vmem:[%s4 + $0x4] sm:$0x1]
    %v1545 = vlaneseq
    %v1546 = vshrl.u32 %v1545, 7
    %v1547 = vsub.s32 0, %v1546
    %v1548 = vrot.slane %v1544, %v1547
    %v1557 = vunpack.c.l.b16 %v1536
    %v1558 = vunpack.c.l.b16 %v1537
    %v1559 = vunpack.c.l.b16 %v1538
    %v1560 = vunpack.c.l.b16 %v1539
    %v1561 = vunpack.c.l.b16 %v1540
    %v1562 = vunpack.c.l.b16 %v1541
    %v1563 = vunpack.c.l.b16 %v1542
    %v1564 = vunpack.c.l.b16 %v1543
    %v1565 = vpack.c.b16 %v1558, %v1557
    %v1566 = vpack.c.b16 %v1560, %v1559
    %v1567 = vpack.c.b16 %v1562, %v1561
    %v1568 = vpack.c.b16 %v1564, %v1563
    %v1574 = vsel %vm368, %v1535, 0
    %1576 = vmatprep.subr.bf16.mxu0 0
    %1577 = vmatpush1.bf16.msra.mxu0 0
    %1578 = vmatprep.subr.bf16.mxu0 0
    %1579 = vmatpush1.bf16.msra.mxu0 0
    %1580 = vmatprep.subr.bf16.mxu0 0
    %1581 = vmatpush1.bf16.msra.mxu0 0
    %1582 = vmatprep.subr.bf16.mxu0 0
    %1583 = vmatpush1.bf16.msra.mxu0 0
    %1584 = vmatprep.subr.bf16.mxu0 0
    %1585 = vmatpush1.bf16.msra.mxu0 %v1568
    %1586 = vmatprep.subr.bf16.mxu0 0
    %1587 = vmatpush1.bf16.msra.mxu0 %v1567
    %1588 = vmatprep.subr.bf16.mxu0 0
    %1589 = vmatpush1.bf16.msra.mxu0 %v1566
    %1590 = vmatprep.subr.bf16.mxu0 0
    %1591 = vmatpush1.bf16.msra.mxu0 %v1565
    %1592 = vmatprep.subr.bf16.mxu0 0
    %1593 = vmatpush2.bf16.msra.mxu0 0
    %1594 = vmatprep.subr.bf16.mxu0 0
    %1595 = vmatpush2.bf16.msra.mxu0 0
    %1596 = vmatprep.subr.bf16.mxu0 0
    %1597 = vmatpush2.bf16.msra.mxu0 0
    %1598 = vmatprep.subr.bf16.mxu0 0
    %1599 = vmatpush2.bf16.msra.mxu0 0
    %1600 = vmatprep.subr.bf16.mxu0 0
    %1601 = vmatpush2.bf16.msra.mxu0 0
    %1602 = vmatprep.subr.bf16.mxu0 0
    %1603 = vmatpush2.bf16.msra.mxu0 0
    %1604 = vmatprep.subr.bf16.mxu0 0
    %1605 = vmatpush2.bf16.msra.mxu0 0
    %1606 = vmatprep.subr.bf16.mxu0 0
    %1607 = vmatpush2.bf16.msra.mxu0 0
    %1608 = vmatprep.mubr.bf16.mxu0 0
    %1609 = vmatmul.mubr.bf16.gmra.mxu0 %v1574
    %v1610 = vpop.f32.mrf.mxu0
    %v1611 = vadd.f32 %v1548, %v1610
    %v1612 = vpop.f32.mrf.mxu0
    %v1613 = vpop.f32.mrf.mxu0
    %v1614 = vpop.f32.mrf.mxu0
    %1615 = vdwg.mxu0
    %v1616 = vtanh.pop %v1611
    %v1617 = vmul.f32 %v1616, %v40
    %v1618 = vadd.f32 %v1617, %v41
    %1620 = vrot.lane.b32.xlu0 %v1618, 64
    %v1621 = vpop.permute.xlu0 %1620
    %v1623 = vmul.f32 %v1618, %v1621
    %v1624 = vtanh.pop %v1623
    %1626 = vrot.lane.b32.xlu0 %v1624, 96
    %v1627 = vpop.permute.xlu0 %1626
    %v1629 = vmul.f32 %v1618, %v1627
    %1631 = vrot.lane.b32.xlu0 %v1629, 32
    %v1632 = vpop.permute.xlu0 %1631
    %1635 = vrot.lane.b32.xlu0 %v1418, 64
    %v1636 = vpop.permute.xlu0 %1635
    %v1638 = vsel %vm171, %v1632, %v1636
    %v1639 = vpack.c.bf16 %v1638, %v1638
    %v1640 = vld [vmem:[#allocation2 + $0x78] sm:$0xf]
    %v1641 = vld [vmem:[#allocation2 + $0x7c] sm:$0xf]
    %v1642 = vld [vmem:[#allocation2 + $0x80] sm:$0xf]
    %v1643 = vld [vmem:[#allocation2 + $0x84] sm:$0xf]
    %v1644 = vld [vmem:[#allocation2 + $0x88] sm:$0xf]
    %v1645 = vld [vmem:[#allocation2 + $0x8c] sm:$0xf]
    %v1646 = vld [vmem:[#allocation2 + $0x90] sm:$0xf]
    %v1647 = vld [vmem:[#allocation2 + $0x94] sm:$0xf]
    %v1648 = vld [vmem:[%s4 + $0x5] sm:$0x1]
    %v1649 = vlaneseq
    %v1650 = vshrl.u32 %v1649, 7
    %v1651 = vsub.s32 0, %v1650
    %v1652 = vrot.slane %v1648, %v1651
    %v1661 = vunpack.c.l.b16 %v1640
    %v1662 = vunpack.c.l.b16 %v1641
    %v1663 = vunpack.c.l.b16 %v1642
    %v1664 = vunpack.c.l.b16 %v1643
    %v1665 = vunpack.c.l.b16 %v1644
    %v1666 = vunpack.c.l.b16 %v1645
    %v1667 = vunpack.c.l.b16 %v1646
    %v1668 = vunpack.c.l.b16 %v1647
    %v1669 = vpack.c.b16 %v1662, %v1661
    %v1670 = vpack.c.b16 %v1664, %v1663
    %v1671 = vpack.c.b16 %v1666, %v1665
    %v1672 = vpack.c.b16 %v1668, %v1667
    %v1678 = vsel %vm368, %v1639, 0
    %1680 = vmatprep.subr.bf16.mxu0 0
    %1681 = vmatpush1.bf16.msra.mxu0 0
    %1682 = vmatprep.subr.bf16.mxu0 0
    %1683 = vmatpush1.bf16.msra.mxu0 0
    %1684 = vmatprep.subr.bf16.mxu0 0
    %1685 = vmatpush1.bf16.msra.mxu0 0
    %1686 = vmatprep.subr.bf16.mxu0 0
    %1687 = vmatpush1.bf16.msra.mxu0 0
    %1688 = vmatprep.subr.bf16.mxu0 0
    %1689 = vmatpush1.bf16.msra.mxu0 %v1672
    %1690 = vmatprep.subr.bf16.mxu0 0
    %1691 = vmatpush1.bf16.msra.mxu0 %v1671
    %1692 = vmatprep.subr.bf16.mxu0 0
    %1693 = vmatpush1.bf16.msra.mxu0 %v1670
    %1694 = vmatprep.subr.bf16.mxu0 0
    %1695 = vmatpush1.bf16.msra.mxu0 %v1669
    %1696 = vmatprep.subr.bf16.mxu0 0
    %1697 = vmatpush2.bf16.msra.mxu0 0
    %1698 = vmatprep.subr.bf16.mxu0 0
    %1699 = vmatpush2.bf16.msra.mxu0 0
    %1700 = vmatprep.subr.bf16.mxu0 0
    %1701 = vmatpush2.bf16.msra.mxu0 0
    %1702 = vmatprep.subr.bf16.mxu0 0
    %1703 = vmatpush2.bf16.msra.mxu0 0
    %1704 = vmatprep.subr.bf16.mxu0 0
    %1705 = vmatpush2.bf16.msra.mxu0 0
    %1706 = vmatprep.subr.bf16.mxu0 0
    %1707 = vmatpush2.bf16.msra.mxu0 0
    %1708 = vmatprep.subr.bf16.mxu0 0
    %1709 = vmatpush2.bf16.msra.mxu0 0
    %1710 = vmatprep.subr.bf16.mxu0 0
    %1711 = vmatpush2.bf16.msra.mxu0 0
    %1712 = vmatprep.mubr.bf16.mxu0 0
    %1713 = vmatmul.mubr.bf16.gmra.mxu0 %v1678
    %v1714 = vpop.f32.mrf.mxu0
    %v1715 = vadd.f32 %v1652, %v1714
    %v1716 = vpop.f32.mrf.mxu0
    %v1717 = vpop.f32.mrf.mxu0
    %v1718 = vpop.f32.mrf.mxu0
    %1719 = vdwg.mxu0
    %v1720 = vtanh.pop %v1715
    %v1721 = vmul.f32 %v1720, %v40
    %v1722 = vadd.f32 %v1721, %v41
    %1724 = vrot.lane.b32.xlu0 %v1722, 64
    %v1725 = vpop.permute.xlu0 %1724
    %v1727 = vmul.f32 %v1722, %v1725
    %v1728 = vtanh.pop %v1727
    %1730 = vrot.lane.b32.xlu0 %v1728, 96
    %v1731 = vpop.permute.xlu0 %1730
    %v1733 = vmul.f32 %v1722, %v1731
    %v1734 = vpack.c.bf16 %v1733, %v1733
    %v1735 = vld [vmem:[#allocation2 + $0x98] sm:$0xf]
    %v1736 = vld [vmem:[#allocation2 + $0x9c] sm:$0xf]
    %v1737 = vld [vmem:[#allocation2 + $0xa0] sm:$0xf]
    %v1738 = vld [vmem:[#allocation2 + $0xa4] sm:$0xf]
    %v1739 = vld [vmem:[%s4 + $0x6] sm:$0x1]
    %v1740 = vlaneseq
    %v1741 = vshrl.u32 %v1740, 7
    %v1742 = vsub.s32 0, %v1741
    %v1743 = vrot.slane %v1739, %v1742
    %1745 = vrot.lane.b32.xlu0 %v1734, 32
    %v1746 = vpop.permute.xlu0 %1745
    %v1751 = vunpack.c.l.b16 %v1735
    %v1752 = vunpack.c.l.b16 %v1736
    %v1753 = vunpack.c.l.b16 %v1737
    %v1754 = vunpack.c.l.b16 %v1738
    %v1755 = vpack.c.b16 %v1752, %v1751
    %v1756 = vpack.c.b16 %v1754, %v1753
    %v1760 = vsel %vm171, %v1746, 0
    %1762 = vmatprep.subr.bf16.mxu0 0
    %1763 = vmatpush1.bf16.msra.mxu0 0
    %1764 = vmatprep.subr.bf16.mxu0 0
    %1765 = vmatpush1.bf16.msra.mxu0 0
    %1766 = vmatprep.subr.bf16.mxu0 0
    %1767 = vmatpush1.bf16.msra.mxu0 0
    %1768 = vmatprep.subr.bf16.mxu0 0
    %1769 = vmatpush1.bf16.msra.mxu0 0
    %1770 = vmatprep.subr.bf16.mxu0 0
    %1771 = vmatpush1.bf16.msra.mxu0 0
    %1772 = vmatprep.subr.bf16.mxu0 0
    %1773 = vmatpush1.bf16.msra.mxu0 0
    %1774 = vmatprep.subr.bf16.mxu0 0
    %1775 = vmatpush1.bf16.msra.mxu0 %v1756
    %1776 = vmatprep.subr.bf16.mxu0 0
    %1777 = vmatpush1.bf16.msra.mxu0 %v1755
    %1778 = vmatprep.subr.bf16.mxu0 0
    %1779 = vmatpush2.bf16.msra.mxu0 0
    %1780 = vmatprep.subr.bf16.mxu0 0
    %1781 = vmatpush2.bf16.msra.mxu0 0
    %1782 = vmatprep.subr.bf16.mxu0 0
    %1783 = vmatpush2.bf16.msra.mxu0 0
    %1784 = vmatprep.subr.bf16.mxu0 0
    %1785 = vmatpush2.bf16.msra.mxu0 0
    %1786 = vmatprep.subr.bf16.mxu0 0
    %1787 = vmatpush2.bf16.msra.mxu0 0
    %1788 = vmatprep.subr.bf16.mxu0 0
    %1789 = vmatpush2.bf16.msra.mxu0 0
    %1790 = vmatprep.subr.bf16.mxu0 0
    %1791 = vmatpush2.bf16.msra.mxu0 0
    %1792 = vmatprep.subr.bf16.mxu0 0
    %1793 = vmatpush2.bf16.msra.mxu0 0
    %1794 = vmatprep.mubr.bf16.mxu0 0
    %1795 = vmatmul.mubr.bf16.gmra.mxu0 %v1760
    %v1796 = vpop.f32.mrf.mxu0
    %v1797 = vadd.f32 %v1743, %v1796
    %v1798 = vpop.f32.mrf.mxu0
    %v1799 = vpop.f32.mrf.mxu0
    %v1800 = vpop.f32.mrf.mxu0
    %1801 = vdwg.mxu0
    %vm1802 = vcmp.eq.s32.totalorder %v36, 9
    %v1803 = vxor.u32 %v1797, 2147483648
    %v1804 = vmul.f32 %v1803, 1.442695
    %v1805 = vpow.pop %v1804
    %v1806 = vadd.f32 %v1805, 1.0
    %v1807 = vrcp.pop %v1806
    %v1808 = vmul.f32 1.0, %v1807
    %v1809 = vsel %vm1802, %v1808, %v1797
    %1810 = vst [vmem:[%s5] sm:$0xff] %v1809
    // Predicated region
    $region26: #{mind_model_forward.1} parent=1 // pred_check
      _
    $region27: #{mind_model_forward.1} parent=1 // pred_check_branch
      %1812 = sbr.rel (0) target = $region29
    $region28: #{mind_model_forward.1} parent=1 // pred_region
      _
    $region29: #{mind_model_forward.1} parent=1 // pred_fallthru
      _
    // Predicated region
    $region30: #{mind_model_forward.1} parent=1 // pred_check
      _
    $region31: #{mind_model_forward.1} parent=1 // pred_check_branch
      %1814 = sbr.rel (0) target = $region33
    $region32: #{mind_model_forward.1} parent=1 // pred_region
      _
    $region33: #{mind_model_forward.1} parent=1 // pred_fallthru
      _
    %1815 = vsyncpa [#allocation3], 1

</llo_original>
